<compile_context>
chip_gen: v6e
topology: v6e:2x2x1
jax: 0.10.0
libtpu: 0.0.40
codegen_flags: <defaults>
</compile_context>

<pallas_src>
import jax
import jax.numpy as jnp
from jax import lax
from jax.experimental import pallas as pl
from jax.experimental.pallas import tpu as pltpu

# ---------------- problem configuration (matches nn.Conv2d(CIN, COUT, 3, padding=1)) -------
N, CIN, H, W = 2, 4, 16, 16          # input NCHW
COUT, KH, KW = 8, 3, 3               # conv: 3x3, stride 1, padding 1 ("same")
PAD = 1
EPS = 1e-5                           # BatchNorm2d default eps
M = N * H * W                        # 512 rows of the im2col matmul
KCOLS = KH * KW * CIN                # 36  (im2col contraction dim)
CPAD = 128                           # lane-dense padded channel dim
MB = 128                             # rows per chunk (bounds live vregs)
NCHUNK = M // MB                     # 4


# ---------------------------------- Pallas kernel ------------------------------------------
def rgb_kernel(x_ref, w_ref, g_ref, b_ref, o_ref):
    # x_ref: (M, KCOLS)     im2col input columns
    # w_ref: (KCOLS, CPAD)  conv weight, zero-padded channels
    # g_ref: (1, CPAD)      BN gamma (0 on padded channels)
    # b_ref: (1, CPAD)      BN beta  (0 on padded channels)
    # o_ref: (M, CPAD)      lane-dense output (also used as conv staging buffer)
    w = w_ref[...]
    ones_row = jnp.ones((1, MB), jnp.float32)

    # ---- pass 1: conv as a single matmul per chunk + single-pass stats (sum, sum-of-sq) ----
    def pass1(c, carry):
        s, sq = carry
        i = pl.multiple_of(c * MB, MB)
        yc = jnp.dot(x_ref[pl.ds(i, MB), :], w, preferred_element_type=jnp.float32)
        o_ref[pl.ds(i, MB), :] = yc
        # route the cross-row reductions through the (otherwise idle) MXU
        s = s + jnp.dot(ones_row, yc, preferred_element_type=jnp.float32)
        sq = sq + jnp.dot(ones_row, yc * yc, preferred_element_type=jnp.float32)
        return s, sq

    zero = jnp.zeros((1, CPAD), jnp.float32)
    s, sq = lax.fori_loop(0, NCHUNK, pass1, (zero, zero), unroll=True)

    # ---- folded BN affine: y = conv * scale + shift  (per-channel prework is tiny) ----
    inv_m = 1.0 / M
    mean = s * inv_m
    var = sq * inv_m - mean * mean               # biased batch variance (training mode)
    scale = g_ref[...] * lax.rsqrt(var + EPS)    # (1, CPAD)   rsqrt -> EUP slot
    shift = b_ref[...] - mean * scale            # (1, CPAD)

    # ---- pass 2: normalize in place (2 VPU ops / element, lane-dense stores) ----
    def pass2(c, _):
        i = pl.multiple_of(c * MB, MB)
        o_ref[pl.ds(i, MB), :] = o_ref[pl.ds(i, MB), :] * scale + shift
        return 0

    lax.fori_loop(0, NCHUNK, pass2, 0, unroll=True)


# ---------------------------------- wrapper (glue) -----------------------------------------
@jax.jit
def rgb_forward(x_nchw, w_oihw, bias, gamma, beta):
    """x_nchw: (N, CIN, H, W) -> (N, COUT, H, W), matching PyTorch RGB.forward (train mode)."""
    # Conv bias is a per-channel constant; training-mode BN mean subtraction cancels it
    # exactly, so it never reaches the kernel (one fewer DMA + broadcast add).
    del bias

    # NCHW -> NHWC, "same" padding for 3x3/stride1/pad1
    x_nhwc = jnp.transpose(x_nchw, (0, 2, 3, 1)).astype(jnp.float32)
    x_pad = jnp.pad(x_nhwc, ((0, 0), (PAD, PAD), (PAD, PAD), (0, 0)))

    # im2col: (M, KH*KW*CIN); column order = ((kh*KW + kw)*CIN + cin), matching the weight.
    # TODO(synk): at larger sizes build the im2col in-kernel from the padded NHWC slab to
    # avoid the 9x-duplicated HBM->VMEM traffic; at (512, 36) ~73 KB the XLA glue is fine.
    cols = [x_pad[:, kh:kh + H, kw:kw + W, :].reshape(M, CIN)
            for kh in range(KH) for kw in range(KW)]
    x_cols = jnp.concatenate(cols, axis=1)                                   # (512, 36)

    # PyTorch weight (COUT, CIN, KH, KW) -> (KH, KW, CIN, COUT) -> (36, COUT) -> pad to 128
    w_cols = jnp.transpose(w_oihw, (2, 3, 1, 0)).reshape(KCOLS, COUT).astype(jnp.float32)
    w_padded = jnp.zeros((KCOLS, CPAD), jnp.float32).at[:, :COUT].set(w_cols)
    g_padded = jnp.zeros((1, CPAD), jnp.float32).at[0, :COUT].set(gamma.astype(jnp.float32))
    b_padded = jnp.zeros((1, CPAD), jnp.float32).at[0, :COUT].set(beta.astype(jnp.float32))

    out_flat = pl.pallas_call(
        rgb_kernel,
        out_shape=jax.ShapeDtypeStruct((M, CPAD), jnp.float32),
        in_specs=[
            pl.BlockSpec(memory_space=pltpu.VMEM),   # x_cols   (512, 36)
            pl.BlockSpec(memory_space=pltpu.VMEM),   # weights  (36, 128)
            pl.BlockSpec(memory_space=pltpu.VMEM),   # gamma    (1, 128)
            pl.BlockSpec(memory_space=pltpu.VMEM),   # beta     (1, 128)
        ],
        out_specs=pl.BlockSpec(memory_space=pltpu.VMEM),
    )(x_cols, w_padded, g_padded, b_padded)

    # (M, CPAD) -> drop padded channels -> NHWC -> NCHW
    out = out_flat[:, :COUT].reshape(N, H, W, COUT)
    return jnp.transpose(out, (0, 3, 1, 2))


# ------------------------------ pure-JAX reference (check) ---------------------------------
def rgb_reference(x_nchw, w_oihw, bias, gamma, beta):
    y = lax.conv_general_dilated(
        x_nchw.astype(jnp.float32), w_oihw.astype(jnp.float32),
        window_strides=(1, 1), padding=((PAD, PAD), (PAD, PAD)),
        dimension_numbers=("NCHW", "OIHW", "NCHW"))
    y = y + bias.reshape(1, COUT, 1, 1)
    mean = jnp.mean(y, axis=(0, 2, 3), keepdims=True)
    var = jnp.mean((y - mean) ** 2, axis=(0, 2, 3), keepdims=True)
    return (y - mean) * lax.rsqrt(var + EPS) * gamma.reshape(1, COUT, 1, 1) \
        + beta.reshape(1, COUT, 1, 1)


if __name__ == "__main__":
    key = jax.random.PRNGKey(0)
    kx, kw, kb, kg, kbe = jax.random.split(key, 5)

    # deterministic synthetic parameters (shapes implied by nn.Conv2d(CIN, COUT, 3, padding=1)
    # and BatchNorm2d(COUT)); NOT a checkpoint load.
    x = jax.random.normal(kx, (N, CIN, H, W), jnp.float32)
    w = jax.random.normal(kw, (COUT, CIN, KH, KW), jnp.float32) * 0.1
    b = jax.random.normal(kb, (COUT,), jnp.float32) * 0.05
    gamma = 1.0 + 0.1 * jax.random.normal(kg, (COUT,), jnp.float32)
    beta = 0.1 * jax.random.normal(kbe, (COUT,), jnp.float32)

    out = jax.block_until_ready(rgb_forward(x, w, b, gamma, beta))
    ref = rgb_reference(x, w, b, gamma, beta)

    assert out.shape == (N, COUT, H, W), out.shape
    assert jnp.allclose(out, ref, atol=1e-4, rtol=1e-4), \
        float(jnp.max(jnp.abs(out - ref)))

    print("KERNEL_OK")
</pallas_src>

<mosaic_0001>
module attributes {stable_mosaic.version = 11 : i64} {
  func.func @rgb_kernel(%arg0: memref<512x36xf32, #tpu.memory_space<vmem>>, %arg1: memref<36x128xf32, #tpu.memory_space<vmem>>, %arg2: memref<1x128xf32, #tpu.memory_space<vmem>>, %arg3: memref<1x128xf32, #tpu.memory_space<vmem>>, %arg4: memref<512x128xf32, #tpu.memory_space<vmem>>) attributes {dimension_semantics = [], scalar_prefetch = 0 : i64, scratch_operands = 0 : i64, tpu.core_type = #tpu.core_type<tc>} {
    %c0 = arith.constant 0 : index
    %c0_0 = arith.constant 0 : index
    %0 = vector.load %arg1[%c0, %c0_0] : memref<36x128xf32, #tpu.memory_space<vmem>>, vector<36x128xf32>
    %cst = arith.constant 1.000000e+00 : f32
    %1 = vector.broadcast %cst : f32 to vector<1x128xf32>
    %cst_1 = arith.constant 0.000000e+00 : f32
    %2 = vector.broadcast %cst_1 : f32 to vector<1x128xf32>
    %c0_i32 = arith.constant 0 : i32
    %c128_i32 = arith.constant 128 : i32
    %3 = arith.muli %c0_i32, %c128_i32 : i32
    %4 = tpu.assume_multiple %3, 128 : i32
    %5 = arith.index_cast %4 : i32 to index
    %c0_2 = arith.constant 0 : index
    %6 = vector.load %arg0[%5, %c0_2] : memref<512x36xf32, #tpu.memory_space<vmem>>, vector<128x36xf32>
    %cst_3 = arith.constant dense<0.000000e+00> : vector<128x128xf32>
    %7 = tpu.matmul %6, %0, %cst_3 {dimension_numbers = #tpu.dot_dimension_numbers<[1], [0], [0], [1], [0, 0, 1, 1], [], []>} : vector<128x36xf32>, vector<36x128xf32>, vector<128x128xf32> -> vector<128x128xf32>
    %8 = arith.index_cast %4 : i32 to index
    %c0_4 = arith.constant 0 : index
    %9 = vector.load %arg4[%8, %c0_4] : memref<512x128xf32, #tpu.memory_space<vmem>>, vector<128x128xf32>
    tpu.vector_store %arg4[%8, %c0_4], %7 {strides = array<i32>} : memref<512x128xf32, #tpu.memory_space<vmem>>, vector<128x128xf32>,
    %cst_5 = arith.constant dense<0.000000e+00> : vector<1x128xf32>
    %10 = tpu.matmul %1, %7, %cst_5 {dimension_numbers = #tpu.dot_dimension_numbers<[1], [0], [0], [1], [0, 0, 1, 1], [], []>} : vector<1x128xf32>, vector<128x128xf32>, vector<1x128xf32> -> vector<1x128xf32>
    %11 = arith.addf %2, %10 : vector<1x128xf32>
    %12 = arith.mulf %7, %7 : vector<128x128xf32>
    %cst_6 = arith.constant dense<0.000000e+00> : vector<1x128xf32>
    %13 = tpu.matmul %1, %12, %cst_6 {dimension_numbers = #tpu.dot_dimension_numbers<[1], [0], [0], [1], [0, 0, 1, 1], [], []>} : vector<1x128xf32>, vector<128x128xf32>, vector<1x128xf32> -> vector<1x128xf32>
    %14 = arith.addf %2, %13 : vector<1x128xf32>
    %c1_i32 = arith.constant 1 : i32
    %c128_i32_7 = arith.constant 128 : i32
    %15 = arith.muli %c1_i32, %c128_i32_7 : i32
    %16 = tpu.assume_multiple %15, 128 : i32
    %17 = arith.index_cast %16 : i32 to index
    %c0_8 = arith.constant 0 : index
    %18 = vector.load %arg0[%17, %c0_8] : memref<512x36xf32, #tpu.memory_space<vmem>>, vector<128x36xf32>
    %cst_9 = arith.constant dense<0.000000e+00> : vector<128x128xf32>
    %19 = tpu.matmul %18, %0, %cst_9 {dimension_numbers = #tpu.dot_dimension_numbers<[1], [0], [0], [1], [0, 0, 1, 1], [], []>} : vector<128x36xf32>, vector<36x128xf32>, vector<128x128xf32> -> vector<128x128xf32>
    %20 = arith.index_cast %16 : i32 to index
    %c0_10 = arith.constant 0 : index
    %21 = vector.load %arg4[%20, %c0_10] : memref<512x128xf32, #tpu.memory_space<vmem>>, vector<128x128xf32>
    tpu.vector_store %arg4[%20, %c0_10], %19 {strides = array<i32>} : memref<512x128xf32, #tpu.memory_space<vmem>>, vector<128x128xf32>,
    %cst_11 = arith.constant dense<0.000000e+00> : vector<1x128xf32>
    %22 = tpu.matmul %1, %19, %cst_11 {dimension_numbers = #tpu.dot_dimension_numbers<[1], [0], [0], [1], [0, 0, 1, 1], [], []>} : vector<1x128xf32>, vector<128x128xf32>, vector<1x128xf32> -> vector<1x128xf32>
    %23 = arith.addf %11, %22 : vector<1x128xf32>
    %24 = arith.mulf %19, %19 : vector<128x128xf32>
    %cst_12 = arith.constant dense<0.000000e+00> : vector<1x128xf32>
    %25 = tpu.matmul %1, %24, %cst_12 {dimension_numbers = #tpu.dot_dimension_numbers<[1], [0], [0], [1], [0, 0, 1, 1], [], []>} : vector<1x128xf32>, vector<128x128xf32>, vector<1x128xf32> -> vector<1x128xf32>
    %26 = arith.addf %14, %25 : vector<1x128xf32>
    %c2_i32 = arith.constant 2 : i32
    %c128_i32_13 = arith.constant 128 : i32
    %27 = arith.muli %c2_i32, %c128_i32_13 : i32
    %28 = tpu.assume_multiple %27, 128 : i32
    %29 = arith.index_cast %28 : i32 to index
    %c0_14 = arith.constant 0 : index
    %30 = vector.load %arg0[%29, %c0_14] : memref<512x36xf32, #tpu.memory_space<vmem>>, vector<128x36xf32>
    %cst_15 = arith.constant dense<0.000000e+00> : vector<128x128xf32>
    %31 = tpu.matmul %30, %0, %cst_15 {dimension_numbers = #tpu.dot_dimension_numbers<[1], [0], [0], [1], [0, 0, 1, 1], [], []>} : vector<128x36xf32>, vector<36x128xf32>, vector<128x128xf32> -> vector<128x128xf32>
    %32 = arith.index_cast %28 : i32 to index
    %c0_16 = arith.constant 0 : index
    %33 = vector.load %arg4[%32, %c0_16] : memref<512x128xf32, #tpu.memory_space<vmem>>, vector<128x128xf32>
    tpu.vector_store %arg4[%32, %c0_16], %31 {strides = array<i32>} : memref<512x128xf32, #tpu.memory_space<vmem>>, vector<128x128xf32>,
    %cst_17 = arith.constant dense<0.000000e+00> : vector<1x128xf32>
    %34 = tpu.matmul %1, %31, %cst_17 {dimension_numbers = #tpu.dot_dimension_numbers<[1], [0], [0], [1], [0, 0, 1, 1], [], []>} : vector<1x128xf32>, vector<128x128xf32>, vector<1x128xf32> -> vector<1x128xf32>
    %35 = arith.addf %23, %34 : vector<1x128xf32>
    %36 = arith.mulf %31, %31 : vector<128x128xf32>
    %cst_18 = arith.constant dense<0.000000e+00> : vector<1x128xf32>
    %37 = tpu.matmul %1, %36, %cst_18 {dimension_numbers = #tpu.dot_dimension_numbers<[1], [0], [0], [1], [0, 0, 1, 1], [], []>} : vector<1x128xf32>, vector<128x128xf32>, vector<1x128xf32> -> vector<1x128xf32>
    %38 = arith.addf %26, %37 : vector<1x128xf32>
    %c3_i32 = arith.constant 3 : i32
    %c128_i32_19 = arith.constant 128 : i32
    %39 = arith.muli %c3_i32, %c128_i32_19 : i32
    %40 = tpu.assume_multiple %39, 128 : i32
    %41 = arith.index_cast %40 : i32 to index
    %c0_20 = arith.constant 0 : index
    %42 = vector.load %arg0[%41, %c0_20] : memref<512x36xf32, #tpu.memory_space<vmem>>, vector<128x36xf32>
    %cst_21 = arith.constant dense<0.000000e+00> : vector<128x128xf32>
    %43 = tpu.matmul %42, %0, %cst_21 {dimension_numbers = #tpu.dot_dimension_numbers<[1], [0], [0], [1], [0, 0, 1, 1], [], []>} : vector<128x36xf32>, vector<36x128xf32>, vector<128x128xf32> -> vector<128x128xf32>
    %44 = arith.index_cast %40 : i32 to index
    %c0_22 = arith.constant 0 : index
    %45 = vector.load %arg4[%44, %c0_22] : memref<512x128xf32, #tpu.memory_space<vmem>>, vector<128x128xf32>
    tpu.vector_store %arg4[%44, %c0_22], %43 {strides = array<i32>} : memref<512x128xf32, #tpu.memory_space<vmem>>, vector<128x128xf32>,
    %cst_23 = arith.constant dense<0.000000e+00> : vector<1x128xf32>
    %46 = tpu.matmul %1, %43, %cst_23 {dimension_numbers = #tpu.dot_dimension_numbers<[1], [0], [0], [1], [0, 0, 1, 1], [], []>} : vector<1x128xf32>, vector<128x128xf32>, vector<1x128xf32> -> vector<1x128xf32>
    %47 = arith.addf %35, %46 : vector<1x128xf32>
    %48 = arith.mulf %43, %43 : vector<128x128xf32>
    %cst_24 = arith.constant dense<0.000000e+00> : vector<1x128xf32>
    %49 = tpu.matmul %1, %48, %cst_24 {dimension_numbers = #tpu.dot_dimension_numbers<[1], [0], [0], [1], [0, 0, 1, 1], [], []>} : vector<1x128xf32>, vector<128x128xf32>, vector<1x128xf32> -> vector<1x128xf32>
    %50 = arith.addf %38, %49 : vector<1x128xf32>
    %c4_i32 = arith.constant 4 : i32
    %cst_25 = arith.constant 0.001953125 : f32
    %51 = vector.broadcast %cst_25 : f32 to vector<1x128xf32>
    %52 = arith.mulf %47, %51 : vector<1x128xf32>
    %cst_26 = arith.constant 0.001953125 : f32
    %53 = vector.broadcast %cst_26 : f32 to vector<1x128xf32>
    %54 = arith.mulf %50, %53 : vector<1x128xf32>
    %55 = arith.mulf %52, %52 : vector<1x128xf32>
    %56 = arith.subf %54, %55 : vector<1x128xf32>
    %c0_27 = arith.constant 0 : index
    %c0_28 = arith.constant 0 : index
    %57 = vector.load %arg2[%c0_27, %c0_28] : memref<1x128xf32, #tpu.memory_space<vmem>>, vector<1x128xf32>
    %cst_29 = arith.constant 9.99999974E-6 : f32
    %58 = vector.broadcast %cst_29 : f32 to vector<1x128xf32>
    %59 = arith.addf %56, %58 : vector<1x128xf32>
    %60 = math.rsqrt %59 : vector<1x128xf32>
    %61 = arith.mulf %57, %60 : vector<1x128xf32>
    %c0_30 = arith.constant 0 : index
    %c0_31 = arith.constant 0 : index
    %62 = vector.load %arg3[%c0_30, %c0_31] : memref<1x128xf32, #tpu.memory_space<vmem>>, vector<1x128xf32>
    %63 = arith.mulf %52, %61 : vector<1x128xf32>
    %64 = arith.subf %62, %63 : vector<1x128xf32>
    %c0_i32_32 = arith.constant 0 : i32
    %c128_i32_33 = arith.constant 128 : i32
    %65 = arith.muli %c0_i32_32, %c128_i32_33 : i32
    %66 = tpu.assume_multiple %65, 128 : i32
    %67 = arith.index_cast %66 : i32 to index
    %c0_34 = arith.constant 0 : index
    %68 = vector.load %arg4[%67, %c0_34] : memref<512x128xf32, #tpu.memory_space<vmem>>, vector<128x128xf32>
    %69 = vector.broadcast %61 : vector<1x128xf32> to vector<128x128xf32>
    %70 = arith.mulf %68, %69 : vector<128x128xf32>
    %71 = vector.broadcast %64 : vector<1x128xf32> to vector<128x128xf32>
    %72 = arith.addf %70, %71 : vector<128x128xf32>
    %73 = arith.index_cast %66 : i32 to index
    %c0_35 = arith.constant 0 : index
    %74 = vector.load %arg4[%73, %c0_35] : memref<512x128xf32, #tpu.memory_space<vmem>>, vector<128x128xf32>
    tpu.vector_store %arg4[%73, %c0_35], %72 {strides = array<i32>} : memref<512x128xf32, #tpu.memory_space<vmem>>, vector<128x128xf32>,
    %c1_i32_36 = arith.constant 1 : i32
    %c128_i32_37 = arith.constant 128 : i32
    %75 = arith.muli %c1_i32_36, %c128_i32_37 : i32
    %76 = tpu.assume_multiple %75, 128 : i32
    %77 = arith.index_cast %76 : i32 to index
    %c0_38 = arith.constant 0 : index
    %78 = vector.load %arg4[%77, %c0_38] : memref<512x128xf32, #tpu.memory_space<vmem>>, vector<128x128xf32>
    %79 = vector.broadcast %61 : vector<1x128xf32> to vector<128x128xf32>
    %80 = arith.mulf %78, %79 : vector<128x128xf32>
    %81 = vector.broadcast %64 : vector<1x128xf32> to vector<128x128xf32>
    %82 = arith.addf %80, %81 : vector<128x128xf32>
    %83 = arith.index_cast %76 : i32 to index
    %c0_39 = arith.constant 0 : index
    %84 = vector.load %arg4[%83, %c0_39] : memref<512x128xf32, #tpu.memory_space<vmem>>, vector<128x128xf32>
    tpu.vector_store %arg4[%83, %c0_39], %82 {strides = array<i32>} : memref<512x128xf32, #tpu.memory_space<vmem>>, vector<128x128xf32>,
    %c2_i32_40 = arith.constant 2 : i32
    %c128_i32_41 = arith.constant 128 : i32
    %85 = arith.muli %c2_i32_40, %c128_i32_41 : i32
    %86 = tpu.assume_multiple %85, 128 : i32
    %87 = arith.index_cast %86 : i32 to index
    %c0_42 = arith.constant 0 : index
    %88 = vector.load %arg4[%87, %c0_42] : memref<512x128xf32, #tpu.memory_space<vmem>>, vector<128x128xf32>
    %89 = vector.broadcast %61 : vector<1x128xf32> to vector<128x128xf32>
    %90 = arith.mulf %88, %89 : vector<128x128xf32>
    %91 = vector.broadcast %64 : vector<1x128xf32> to vector<128x128xf32>
    %92 = arith.addf %90, %91 : vector<128x128xf32>
    %93 = arith.index_cast %86 : i32 to index
    %c0_43 = arith.constant 0 : index
    %94 = vector.load %arg4[%93, %c0_43] : memref<512x128xf32, #tpu.memory_space<vmem>>, vector<128x128xf32>
    tpu.vector_store %arg4[%93, %c0_43], %92 {strides = array<i32>} : memref<512x128xf32, #tpu.memory_space<vmem>>, vector<128x128xf32>,
    %c3_i32_44 = arith.constant 3 : i32
    %c128_i32_45 = arith.constant 128 : i32
    %95 = arith.muli %c3_i32_44, %c128_i32_45 : i32
    %96 = tpu.assume_multiple %95, 128 : i32
    %97 = arith.index_cast %96 : i32 to index
    %c0_46 = arith.constant 0 : index
    %98 = vector.load %arg4[%97, %c0_46] : memref<512x128xf32, #tpu.memory_space<vmem>>, vector<128x128xf32>
    %99 = vector.broadcast %61 : vector<1x128xf32> to vector<128x128xf32>
    %100 = arith.mulf %98, %99 : vector<128x128xf32>
    %101 = vector.broadcast %64 : vector<1x128xf32> to vector<128x128xf32>
    %102 = arith.addf %100, %101 : vector<128x128xf32>
    %103 = arith.index_cast %96 : i32 to index
    %c0_47 = arith.constant 0 : index
    %104 = vector.load %arg4[%103, %c0_47] : memref<512x128xf32, #tpu.memory_space<vmem>>, vector<128x128xf32>
    tpu.vector_store %arg4[%103, %c0_47], %102 {strides = array<i32>} : memref<512x128xf32, #tpu.memory_space<vmem>>, vector<128x128xf32>,
    %c4_i32_48 = arith.constant 4 : i32
    return
  }
}

</mosaic_0001>

<llo_original>
// kernel: rgb_forward.1
$region0: #{rgb_forward.1}
  #allocation0 [shape = 'u32[]', space=smem, size = 0x4, offset = 0x4, fixed_abs, tag = 'smem constant byte address 0x4 - core index']
  #allocation1 [shape = 'u32[144,128]{1,0:T(1,128)}', space=vmem, size = 0x12000, scoped, tag = 'internal scratch']
  %s0 = inlined_call_operand.vmem [shape: f32[512,36], index: 0, kind: input, shape index: {}]
  %s1 = inlined_call_operand.vmem [shape: f32[36,128], index: 1, kind: input, shape index: {}]
  %s2 = inlined_call_operand.vmem [shape: f32[1,128], index: 2, kind: input, shape index: {}]
  %s3 = inlined_call_operand.vmem [shape: f32[1,128], index: 3, kind: input, shape index: {}]
  %s4 = inlined_call_operand.vmem [shape: f32[512,128], index: 4, kind: output, shape index: {}]
  %s5 = sld [smem:[#allocation0]]
  $region26: #{rgb_forward.1} parent=0
    _
  %s7 = ssub.s32 1, %s5
  %s8 = scalar_select 0, %s7, %s5
  // Predicated region
  $region2: #{rgb_forward.1} parent=0 // pred_check
    _
  $region3: #{rgb_forward.1} parent=0 // pred_check_branch
    %10 = sbr.rel (0) target = $region5
  $region4: #{rgb_forward.1} parent=0 // pred_region
    _
  $region5: #{rgb_forward.1} parent=0 // pred_fallthru
    _
  // Predicated region
  $region6: #{rgb_forward.1} parent=0 // pred_check
    _
  $region7: #{rgb_forward.1} parent=0 // pred_check_branch
    %12 = sbr.rel (0) target = $region9
  $region8: #{rgb_forward.1} parent=0 // pred_region
    _
  $region9: #{rgb_forward.1} parent=0 // pred_fallthru
    _
  // Predicated region
  $region10: #{rgb_forward.1} parent=0 // pred_check
    _
  $region11: #{rgb_forward.1} parent=0 // pred_check_branch
    %14 = sbr.rel (0) target = $region13
  $region12: #{rgb_forward.1} parent=0 // pred_region
    _
  $region13: #{rgb_forward.1} parent=0 // pred_fallthru
    _
  // Predicated region
  $region14: #{rgb_forward.1} parent=0 // pred_check
    _
  $region15: #{rgb_forward.1} parent=0 // pred_check_branch
    %16 = sbr.rel (0) target = $region17
  $region16: #{rgb_forward.1} parent=0 // pred_region
    _
  $region17: #{rgb_forward.1} parent=0 // pred_fallthru
    _
  %v17 = vld [vmem:[%s1] sm:$0xff]
  %v18 = vld [vmem:[%s1 + $0x8] sm:$0xff]
  %v19 = vld [vmem:[%s1 + $0x10] sm:$0xff]
  %v20 = vld [vmem:[%s1 + $0x18] sm:$0xff]
  %v21 = vld [vmem:[%s1 + $0x20] sm:$0xf]
  %v22 = vld [vmem:[%s0] sm:$0xff]
  %v23 = vld [vmem:[%s0 + $0x8] sm:$0xff]
  %v24 = vld [vmem:[%s0 + $0x10] sm:$0xff]
  %v25 = vld [vmem:[%s0 + $0x18] sm:$0xff]
  %v26 = vld [vmem:[%s0 + $0x20] sm:$0xff]
  %v27 = vld [vmem:[%s0 + $0x28] sm:$0xff]
  %v28 = vld [vmem:[%s0 + $0x30] sm:$0xff]
  %v29 = vld [vmem:[%s0 + $0x38] sm:$0xff]
  %v30 = vld [vmem:[%s0 + $0x40] sm:$0xff]
  %v31 = vld [vmem:[%s0 + $0x48] sm:$0xff]
  %v32 = vld [vmem:[%s0 + $0x50] sm:$0xff]
  %v33 = vld [vmem:[%s0 + $0x58] sm:$0xff]
  %v34 = vld [vmem:[%s0 + $0x60] sm:$0xff]
  %v35 = vld [vmem:[%s0 + $0x68] sm:$0xff]
  %v36 = vld [vmem:[%s0 + $0x70] sm:$0xff]
  %v37 = vld [vmem:[%s0 + $0x78] sm:$0xff]
  %vm38 = vcmask 293888
  %v40 = vsel %vm38, %v22, 0
  %v43 = vsel %vm38, %v23, 0
  %v46 = vsel %vm38, %v24, 0
  %v49 = vsel %vm38, %v25, 0
  %v52 = vsel %vm38, %v26, 0
  %v55 = vsel %vm38, %v27, 0
  %v58 = vsel %vm38, %v28, 0
  %v61 = vsel %vm38, %v29, 0
  %v64 = vsel %vm38, %v30, 0
  %v67 = vsel %vm38, %v31, 0
  %v70 = vsel %vm38, %v32, 0
  %v73 = vsel %vm38, %v33, 0
  %v76 = vsel %vm38, %v34, 0
  %v79 = vsel %vm38, %v35, 0
  %v82 = vsel %vm38, %v36, 0
  %v85 = vsel %vm38, %v37, 0
  %vm87 = vcmask 1043456
  %v89 = vsel %vm87, %v21, 0
  %91 = vmatprep.subr.mxu0 0.0
  %92 = vmatpush1.msra.mxu0 0.0
  %93 = vmatprep.subr.mxu0 0.0
  %94 = vmatpush1.msra.mxu0 0.0
  %95 = vmatprep.subr.mxu0 0.0
  %96 = vmatpush1.msra.mxu0 0.0
  %97 = vmatprep.subr.mxu0 0.0
  %98 = vmatpush1.msra.mxu0 0.0
  %99 = vmatprep.subr.mxu0 0.0
  %100 = vmatpush1.msra.mxu0 0.0
  %101 = vmatprep.subr.mxu0 0.0
  %102 = vmatpush1.msra.mxu0 0.0
  %103 = vmatprep.subr.mxu0 0.0
  %104 = vmatpush1.msra.mxu0 0.0
  %105 = vmatprep.subr.mxu0 0.0
  %106 = vmatpush1.msra.mxu0 0.0
  %107 = vmatprep.subr.mxu0 0.0
  %108 = vmatpush1.msra.mxu0 0.0
  %109 = vmatprep.subr.mxu0 0.0
  %110 = vmatpush1.msra.mxu0 0.0
  %111 = vmatprep.subr.mxu0 0.0
  %112 = vmatpush1.msra.mxu0 0.0
  %113 = vmatprep.subr.mxu0 0.0
  %114 = vmatpush1.msra.mxu0 %v89
  %115 = vmatprep.subr.mxu0 0.0
  %116 = vmatpush1.msra.mxu0 %v20
  %117 = vmatprep.subr.mxu0 0.0
  %118 = vmatpush1.msra.mxu0 %v19
  %119 = vmatprep.subr.mxu0 0.0
  %120 = vmatpush1.msra.mxu0 %v18
  %121 = vmatprep.subr.mxu0 0.0
  %122 = vmatpush1.msra.mxu0 %v17
  %123 = vmatprep.subr.mxu0 0.0
  %124 = vmatpush2.msra.mxu0 0.0
  %125 = vmatprep.subr.mxu0 0.0
  %126 = vmatpush2.msra.mxu0 0.0
  %127 = vmatprep.subr.mxu0 0.0
  %128 = vmatpush2.msra.mxu0 0.0
  %129 = vmatprep.subr.mxu0 0.0
  %130 = vmatpush2.msra.mxu0 0.0
  %131 = vmatprep.subr.mxu0 0.0
  %132 = vmatpush2.msra.mxu0 0.0
  %133 = vmatprep.subr.mxu0 0.0
  %134 = vmatpush2.msra.mxu0 0.0
  %135 = vmatprep.subr.mxu0 0.0
  %136 = vmatpush2.msra.mxu0 0.0
  %137 = vmatprep.subr.mxu0 0.0
  %138 = vmatpush2.msra.mxu0 0.0
  %139 = vmatprep.subr.mxu0 0.0
  %140 = vmatpush2.msra.mxu0 0.0
  %141 = vmatprep.subr.mxu0 0.0
  %142 = vmatpush2.msra.mxu0 0.0
  %143 = vmatprep.subr.mxu0 0.0
  %144 = vmatpush2.msra.mxu0 0.0
  %145 = vmatprep.subr.mxu0 0.0
  %146 = vmatpush2.msra.mxu0 0.0
  %147 = vmatprep.subr.mxu0 0.0
  %148 = vmatpush2.msra.mxu0 0.0
  %149 = vmatprep.subr.mxu0 0.0
  %150 = vmatpush2.msra.mxu0 0.0
  %151 = vmatprep.subr.mxu0 0.0
  %152 = vmatpush2.msra.mxu0 0.0
  %153 = vmatprep.subr.mxu0 0.0
  %154 = vmatpush2.msra.mxu0 0.0
  %155 = vmatprep.mubr.f32.mxu0 0.0
  %156 = vmatmul.mubr.f32.gmra.mxu0 %v40
  %v157 = vpop.f32.mrf.mxu0
  %v158 = vadd.f32 0.0, %v157
  %v159 = vpop.f32.mrf.mxu0
  %160 = vmatprep.mubr.f32.mxu0 0.0
  %161 = vmatmul.mubr.f32.gmra.mxu0 %v43
  %v162 = vpop.f32.mrf.mxu0
  %v163 = vadd.f32 0.0, %v162
  %v164 = vpop.f32.mrf.mxu0
  %165 = vmatprep.mubr.f32.mxu0 0.0
  %166 = vmatmul.mubr.f32.gmra.mxu0 %v46
  %v167 = vpop.f32.mrf.mxu0
  %v168 = vadd.f32 0.0, %v167
  %v169 = vpop.f32.mrf.mxu0
  %170 = vmatprep.mubr.f32.mxu0 0.0
  %171 = vmatmul.mubr.f32.gmra.mxu0 %v49
  %v172 = vpop.f32.mrf.mxu0
  %v173 = vadd.f32 0.0, %v172
  %v174 = vpop.f32.mrf.mxu0
  %175 = vmatprep.mubr.f32.mxu0 0.0
  %176 = vmatmul.mubr.f32.gmra.mxu0 %v52
  %v177 = vpop.f32.mrf.mxu0
  %v178 = vadd.f32 0.0, %v177
  %v179 = vpop.f32.mrf.mxu0
  %180 = vmatprep.mubr.f32.mxu0 0.0
  %181 = vmatmul.mubr.f32.gmra.mxu0 %v55
  %v182 = vpop.f32.mrf.mxu0
  %v183 = vadd.f32 0.0, %v182
  %v184 = vpop.f32.mrf.mxu0
  %185 = vmatprep.mubr.f32.mxu0 0.0
  %186 = vmatmul.mubr.f32.gmra.mxu0 %v58
  %v187 = vpop.f32.mrf.mxu0
  %v188 = vadd.f32 0.0, %v187
  %v189 = vpop.f32.mrf.mxu0
  %190 = vmatprep.mubr.f32.mxu0 0.0
  %191 = vmatmul.mubr.f32.gmra.mxu0 %v61
  %v192 = vpop.f32.mrf.mxu0
  %v193 = vadd.f32 0.0, %v192
  %v194 = vpop.f32.mrf.mxu0
  %195 = vmatprep.mubr.f32.mxu0 0.0
  %196 = vmatmul.mubr.f32.gmra.mxu0 %v64
  %v197 = vpop.f32.mrf.mxu0
  %v198 = vadd.f32 0.0, %v197
  %v199 = vpop.f32.mrf.mxu0
  %200 = vmatprep.mubr.f32.mxu0 0.0
  %201 = vmatmul.mubr.f32.gmra.mxu0 %v67
  %v202 = vpop.f32.mrf.mxu0
  %v203 = vadd.f32 0.0, %v202
  %v204 = vpop.f32.mrf.mxu0
  %205 = vmatprep.mubr.f32.mxu0 0.0
  %206 = vmatmul.mubr.f32.gmra.mxu0 %v70
  %v207 = vpop.f32.mrf.mxu0
  %v208 = vadd.f32 0.0, %v207
  %v209 = vpop.f32.mrf.mxu0
  %210 = vmatprep.mubr.f32.mxu0 0.0
  %211 = vmatmul.mubr.f32.gmra.mxu0 %v73
  %v212 = vpop.f32.mrf.mxu0
  %v213 = vadd.f32 0.0, %v212
  %v214 = vpop.f32.mrf.mxu0
  %215 = vmatprep.mubr.f32.mxu0 0.0
  %216 = vmatmul.mubr.f32.gmra.mxu0 %v76
  %v217 = vpop.f32.mrf.mxu0
  %v218 = vadd.f32 0.0, %v217
  %v219 = vpop.f32.mrf.mxu0
  %220 = vmatprep.mubr.f32.mxu0 0.0
  %221 = vmatmul.mubr.f32.gmra.mxu0 %v79
  %v222 = vpop.f32.mrf.mxu0
  %v223 = vadd.f32 0.0, %v222
  %v224 = vpop.f32.mrf.mxu0
  %225 = vmatprep.mubr.f32.mxu0 0.0
  %226 = vmatmul.mubr.f32.gmra.mxu0 %v82
  %v227 = vpop.f32.mrf.mxu0
  %v228 = vadd.f32 0.0, %v227
  %v229 = vpop.f32.mrf.mxu0
  %230 = vmatprep.mubr.f32.mxu0 0.0
  %231 = vmatmul.mubr.f32.gmra.mxu0 %v85
  %v232 = vpop.f32.mrf.mxu0
  %v233 = vadd.f32 0.0, %v232
  %v234 = vpop.f32.mrf.mxu0
  %235 = vdwg.mxu0
  %236 = vst [vmem:[%s4] sm:$0xff] %v158
  %237 = vst [vmem:[%s4 + $0x8] sm:$0xff] %v163
  %238 = vst [vmem:[%s4 + $0x10] sm:$0xff] %v168
  %239 = vst [vmem:[%s4 + $0x18] sm:$0xff] %v173
  %240 = vst [vmem:[%s4 + $0x20] sm:$0xff] %v178
  %241 = vst [vmem:[%s4 + $0x28] sm:$0xff] %v183
  %242 = vst [vmem:[%s4 + $0x30] sm:$0xff] %v188
  %243 = vst [vmem:[%s4 + $0x38] sm:$0xff] %v193
  %244 = vst [vmem:[%s4 + $0x40] sm:$0xff] %v198
  %245 = vst [vmem:[%s4 + $0x48] sm:$0xff] %v203
  %246 = vst [vmem:[%s4 + $0x50] sm:$0xff] %v208
  %247 = vst [vmem:[%s4 + $0x58] sm:$0xff] %v213
  %248 = vst [vmem:[%s4 + $0x60] sm:$0xff] %v218
  %249 = vst [vmem:[%s4 + $0x68] sm:$0xff] %v223
  %250 = vst [vmem:[%s4 + $0x70] sm:$0xff] %v228
  %251 = vst [vmem:[%s4 + $0x78] sm:$0xff] %v233
  %v252 = vmul.f32 %v158, %v158
  %v253 = vmul.f32 %v163, %v163
  %v254 = vmul.f32 %v168, %v168
  %v255 = vmul.f32 %v173, %v173
  %v256 = vmul.f32 %v178, %v178
  %v257 = vmul.f32 %v183, %v183
  %v258 = vmul.f32 %v188, %v188
  %v259 = vmul.f32 %v193, %v193
  %v260 = vmul.f32 %v198, %v198
  %v261 = vmul.f32 %v203, %v203
  %v262 = vmul.f32 %v208, %v208
  %v263 = vmul.f32 %v213, %v213
  %v264 = vmul.f32 %v218, %v218
  %v265 = vmul.f32 %v223, %v223
  %v266 = vmul.f32 %v228, %v228
  %v267 = vmul.f32 %v233, %v233
  %s268 = scalar_lea.vmem %s0, 128
  %v269 = vld [vmem:[%s268] sm:$0xff]
  %v270 = vld [vmem:[%s268 + $0x8] sm:$0xff]
  %v271 = vld [vmem:[%s268 + $0x10] sm:$0xff]
  %v272 = vld [vmem:[%s268 + $0x18] sm:$0xff]
  %v273 = vld [vmem:[%s268 + $0x20] sm:$0xff]
  %v274 = vld [vmem:[%s268 + $0x28] sm:$0xff]
  %v275 = vld [vmem:[%s268 + $0x30] sm:$0xff]
  %v276 = vld [vmem:[%s268 + $0x38] sm:$0xff]
  %v277 = vld [vmem:[%s268 + $0x40] sm:$0xff]
  %v278 = vld [vmem:[%s268 + $0x48] sm:$0xff]
  %v279 = vld [vmem:[%s268 + $0x50] sm:$0xff]
  %v280 = vld [vmem:[%s268 + $0x58] sm:$0xff]
  %v281 = vld [vmem:[%s268 + $0x60] sm:$0xff]
  %v282 = vld [vmem:[%s268 + $0x68] sm:$0xff]
  %v283 = vld [vmem:[%s268 + $0x70] sm:$0xff]
  %v284 = vld [vmem:[%s268 + $0x78] sm:$0xff]
  %v286 = vsel %vm38, %v269, 0
  %v289 = vsel %vm38, %v270, 0
  %v292 = vsel %vm38, %v271, 0
  %v295 = vsel %vm38, %v272, 0
  %v298 = vsel %vm38, %v273, 0
  %v301 = vsel %vm38, %v274, 0
  %v304 = vsel %vm38, %v275, 0
  %v307 = vsel %vm38, %v276, 0
  %v310 = vsel %vm38, %v277, 0
  %v313 = vsel %vm38, %v278, 0
  %v316 = vsel %vm38, %v279, 0
  %v319 = vsel %vm38, %v280, 0
  %v322 = vsel %vm38, %v281, 0
  %v325 = vsel %vm38, %v282, 0
  %v328 = vsel %vm38, %v283, 0
  %v331 = vsel %vm38, %v284, 0
  %333 = vmatprep.subr.mxu0 0.0
  %334 = vmatpush1.msra.mxu0 0.0
  %335 = vmatprep.subr.mxu0 0.0
  %336 = vmatpush1.msra.mxu0 0.0
  %337 = vmatprep.subr.mxu0 0.0
  %338 = vmatpush1.msra.mxu0 0.0
  %339 = vmatprep.subr.mxu0 0.0
  %340 = vmatpush1.msra.mxu0 0.0
  %341 = vmatprep.subr.mxu0 0.0
  %342 = vmatpush1.msra.mxu0 0.0
  %343 = vmatprep.subr.mxu0 0.0
  %344 = vmatpush1.msra.mxu0 0.0
  %345 = vmatprep.subr.mxu0 0.0
  %346 = vmatpush1.msra.mxu0 0.0
  %347 = vmatprep.subr.mxu0 0.0
  %348 = vmatpush1.msra.mxu0 0.0
  %349 = vmatprep.subr.mxu0 0.0
  %350 = vmatpush1.msra.mxu0 0.0
  %351 = vmatprep.subr.mxu0 0.0
  %352 = vmatpush1.msra.mxu0 0.0
  %353 = vmatprep.subr.mxu0 0.0
  %354 = vmatpush1.msra.mxu0 0.0
  %355 = vmatprep.subr.mxu0 0.0
  %356 = vmatpush1.msra.mxu0 %v89
  %357 = vmatprep.subr.mxu0 0.0
  %358 = vmatpush1.msra.mxu0 %v20
  %359 = vmatprep.subr.mxu0 0.0
  %360 = vmatpush1.msra.mxu0 %v19
  %361 = vmatprep.subr.mxu0 0.0
  %362 = vmatpush1.msra.mxu0 %v18
  %363 = vmatprep.subr.mxu0 0.0
  %364 = vmatpush1.msra.mxu0 %v17
  %365 = vmatprep.subr.mxu0 0.0
  %366 = vmatpush2.msra.mxu0 0.0
  %367 = vmatprep.subr.mxu0 0.0
  %368 = vmatpush2.msra.mxu0 0.0
  %369 = vmatprep.subr.mxu0 0.0
  %370 = vmatpush2.msra.mxu0 0.0
  %371 = vmatprep.subr.mxu0 0.0
  %372 = vmatpush2.msra.mxu0 0.0
  %373 = vmatprep.subr.mxu0 0.0
  %374 = vmatpush2.msra.mxu0 0.0
  %375 = vmatprep.subr.mxu0 0.0
  %376 = vmatpush2.msra.mxu0 0.0
  %377 = vmatprep.subr.mxu0 0.0
  %378 = vmatpush2.msra.mxu0 0.0
  %379 = vmatprep.subr.mxu0 0.0
  %380 = vmatpush2.msra.mxu0 0.0
  %381 = vmatprep.subr.mxu0 0.0
  %382 = vmatpush2.msra.mxu0 0.0
  %383 = vmatprep.subr.mxu0 0.0
  %384 = vmatpush2.msra.mxu0 0.0
  %385 = vmatprep.subr.mxu0 0.0
  %386 = vmatpush2.msra.mxu0 0.0
  %387 = vmatprep.subr.mxu0 0.0
  %388 = vmatpush2.msra.mxu0 0.0
  %389 = vmatprep.subr.mxu0 0.0
  %390 = vmatpush2.msra.mxu0 0.0
  %391 = vmatprep.subr.mxu0 0.0
  %392 = vmatpush2.msra.mxu0 0.0
  %393 = vmatprep.subr.mxu0 0.0
  %394 = vmatpush2.msra.mxu0 0.0
  %395 = vmatprep.subr.mxu0 0.0
  %396 = vmatpush2.msra.mxu0 0.0
  %397 = vmatprep.mubr.f32.mxu0 0.0
  %398 = vmatmul.mubr.f32.gmra.mxu0 %v286
  %v399 = vpop.f32.mrf.mxu0
  %v400 = vadd.f32 0.0, %v399
  %v401 = vpop.f32.mrf.mxu0
  %402 = vmatprep.mubr.f32.mxu0 0.0
  %403 = vmatmul.mubr.f32.gmra.mxu0 %v289
  %v404 = vpop.f32.mrf.mxu0
  %v405 = vadd.f32 0.0, %v404
  %v406 = vpop.f32.mrf.mxu0
  %407 = vmatprep.mubr.f32.mxu0 0.0
  %408 = vmatmul.mubr.f32.gmra.mxu0 %v292
  %v409 = vpop.f32.mrf.mxu0
  %v410 = vadd.f32 0.0, %v409
  %v411 = vpop.f32.mrf.mxu0
  %412 = vmatprep.mubr.f32.mxu0 0.0
  %413 = vmatmul.mubr.f32.gmra.mxu0 %v295
  %v414 = vpop.f32.mrf.mxu0
  %v415 = vadd.f32 0.0, %v414
  %v416 = vpop.f32.mrf.mxu0
  %417 = vmatprep.mubr.f32.mxu0 0.0
  %418 = vmatmul.mubr.f32.gmra.mxu0 %v298
  %v419 = vpop.f32.mrf.mxu0
  %v420 = vadd.f32 0.0, %v419
  %v421 = vpop.f32.mrf.mxu0
  %422 = vmatprep.mubr.f32.mxu0 0.0
  %423 = vmatmul.mubr.f32.gmra.mxu0 %v301
  %v424 = vpop.f32.mrf.mxu0
  %v425 = vadd.f32 0.0, %v424
  %v426 = vpop.f32.mrf.mxu0
  %427 = vmatprep.mubr.f32.mxu0 0.0
  %428 = vmatmul.mubr.f32.gmra.mxu0 %v304
  %v429 = vpop.f32.mrf.mxu0
  %v430 = vadd.f32 0.0, %v429
  %v431 = vpop.f32.mrf.mxu0
  %432 = vmatprep.mubr.f32.mxu0 0.0
  %433 = vmatmul.mubr.f32.gmra.mxu0 %v307
  %v434 = vpop.f32.mrf.mxu0
  %v435 = vadd.f32 0.0, %v434
  %v436 = vpop.f32.mrf.mxu0
  %437 = vmatprep.mubr.f32.mxu0 0.0
  %438 = vmatmul.mubr.f32.gmra.mxu0 %v310
  %v439 = vpop.f32.mrf.mxu0
  %v440 = vadd.f32 0.0, %v439
  %v441 = vpop.f32.mrf.mxu0
  %442 = vmatprep.mubr.f32.mxu0 0.0
  %443 = vmatmul.mubr.f32.gmra.mxu0 %v313
  %v444 = vpop.f32.mrf.mxu0
  %v445 = vadd.f32 0.0, %v444
  %v446 = vpop.f32.mrf.mxu0
  %447 = vmatprep.mubr.f32.mxu0 0.0
  %448 = vmatmul.mubr.f32.gmra.mxu0 %v316
  %v449 = vpop.f32.mrf.mxu0
  %v450 = vadd.f32 0.0, %v449
  %v451 = vpop.f32.mrf.mxu0
  %452 = vmatprep.mubr.f32.mxu0 0.0
  %453 = vmatmul.mubr.f32.gmra.mxu0 %v319
  %v454 = vpop.f32.mrf.mxu0
  %v455 = vadd.f32 0.0, %v454
  %v456 = vpop.f32.mrf.mxu0
  %457 = vmatprep.mubr.f32.mxu0 0.0
  %458 = vmatmul.mubr.f32.gmra.mxu0 %v322
  %v459 = vpop.f32.mrf.mxu0
  %v460 = vadd.f32 0.0, %v459
  %v461 = vpop.f32.mrf.mxu0
  %462 = vmatprep.mubr.f32.mxu0 0.0
  %463 = vmatmul.mubr.f32.gmra.mxu0 %v325
  %v464 = vpop.f32.mrf.mxu0
  %v465 = vadd.f32 0.0, %v464
  %v466 = vpop.f32.mrf.mxu0
  %467 = vmatprep.mubr.f32.mxu0 0.0
  %468 = vmatmul.mubr.f32.gmra.mxu0 %v328
  %v469 = vpop.f32.mrf.mxu0
  %v470 = vadd.f32 0.0, %v469
  %v471 = vpop.f32.mrf.mxu0
  %472 = vmatprep.mubr.f32.mxu0 0.0
  %473 = vmatmul.mubr.f32.gmra.mxu0 %v331
  %v474 = vpop.f32.mrf.mxu0
  %v475 = vadd.f32 0.0, %v474
  %v476 = vpop.f32.mrf.mxu0
  %477 = vdwg.mxu0
  %s478 = scalar_lea.vmem %s4, 128
  %479 = vst [vmem:[%s478] sm:$0xff] %v400
  %480 = vst [vmem:[%s478 + $0x8] sm:$0xff] %v405
  %481 = vst [vmem:[%s478 + $0x10] sm:$0xff] %v410
  %482 = vst [vmem:[%s478 + $0x18] sm:$0xff] %v415
  %483 = vst [vmem:[%s478 + $0x20] sm:$0xff] %v420
  %484 = vst [vmem:[%s478 + $0x28] sm:$0xff] %v425
  %485 = vst [vmem:[%s478 + $0x30] sm:$0xff] %v430
  %486 = vst [vmem:[%s478 + $0x38] sm:$0xff] %v435
  %487 = vst [vmem:[%s478 + $0x40] sm:$0xff] %v440
  %488 = vst [vmem:[%s478 + $0x48] sm:$0xff] %v445
  %489 = vst [vmem:[%s478 + $0x50] sm:$0xff] %v450
  %490 = vst [vmem:[%s478 + $0x58] sm:$0xff] %v455
  %491 = vst [vmem:[%s478 + $0x60] sm:$0xff] %v460
  %492 = vst [vmem:[%s478 + $0x68] sm:$0xff] %v465
  %493 = vst [vmem:[%s478 + $0x70] sm:$0xff] %v470
  %494 = vst [vmem:[%s478 + $0x78] sm:$0xff] %v475
  %495 = vmatprep.subr.mxu0 0.0
  %496 = vmatpush1.msra.mxu0 %v475
  %497 = vmatprep.subr.mxu0 0.0
  %498 = vmatpush1.msra.mxu0 %v470
  %499 = vmatprep.subr.mxu0 0.0
  %500 = vmatpush1.msra.mxu0 %v465
  %501 = vmatprep.subr.mxu0 0.0
  %502 = vmatpush1.msra.mxu0 %v460
  %503 = vmatprep.subr.mxu0 0.0
  %504 = vmatpush1.msra.mxu0 %v455
  %505 = vmatprep.subr.mxu0 0.0
  %506 = vmatpush1.msra.mxu0 %v450
  %507 = vmatprep.subr.mxu0 0.0
  %508 = vmatpush1.msra.mxu0 %v445
  %509 = vmatprep.subr.mxu0 0.0
  %510 = vmatpush1.msra.mxu0 %v440
  %511 = vmatprep.subr.mxu0 0.0
  %512 = vmatpush1.msra.mxu0 %v435
  %513 = vmatprep.subr.mxu0 0.0
  %514 = vmatpush1.msra.mxu0 %v430
  %515 = vmatprep.subr.mxu0 0.0
  %516 = vmatpush1.msra.mxu0 %v425
  %517 = vmatprep.subr.mxu0 0.0
  %518 = vmatpush1.msra.mxu0 %v420
  %519 = vmatprep.subr.mxu0 0.0
  %520 = vmatpush1.msra.mxu0 %v415
  %521 = vmatprep.subr.mxu0 0.0
  %522 = vmatpush1.msra.mxu0 %v410
  %523 = vmatprep.subr.mxu0 0.0
  %524 = vmatpush1.msra.mxu0 %v405
  %525 = vmatprep.subr.mxu0 0.0
  %526 = vmatpush1.msra.mxu0 %v400
  %527 = vmatprep.subr.mxu0 0.0
  %528 = vmatpush2.msra.mxu0 0.0
  %529 = vmatprep.subr.mxu0 0.0
  %530 = vmatpush2.msra.mxu0 0.0
  %531 = vmatprep.subr.mxu0 0.0
  %532 = vmatpush2.msra.mxu0 0.0
  %533 = vmatprep.subr.mxu0 0.0
  %534 = vmatpush2.msra.mxu0 0.0
  %535 = vmatprep.subr.mxu0 0.0
  %536 = vmatpush2.msra.mxu0 0.0
  %537 = vmatprep.subr.mxu0 0.0
  %538 = vmatpush2.msra.mxu0 0.0
  %539 = vmatprep.subr.mxu0 0.0
  %540 = vmatpush2.msra.mxu0 0.0
  %541 = vmatprep.subr.mxu0 0.0
  %542 = vmatpush2.msra.mxu0 0.0
  %543 = vmatprep.subr.mxu0 0.0
  %544 = vmatpush2.msra.mxu0 0.0
  %545 = vmatprep.subr.mxu0 0.0
  %546 = vmatpush2.msra.mxu0 0.0
  %547 = vmatprep.subr.mxu0 0.0
  %548 = vmatpush2.msra.mxu0 0.0
  %549 = vmatprep.subr.mxu0 0.0
  %550 = vmatpush2.msra.mxu0 0.0
  %551 = vmatprep.subr.mxu0 0.0
  %552 = vmatpush2.msra.mxu0 0.0
  %553 = vmatprep.subr.mxu0 0.0
  %554 = vmatpush2.msra.mxu0 0.0
  %555 = vmatprep.subr.mxu0 0.0
  %556 = vmatpush2.msra.mxu0 0.0
  %557 = vmatprep.subr.mxu0 0.0
  %558 = vmatpush2.msra.mxu0 0.0
  %559 = vmatprep.mubr.f32.mxu0 0.0
  %560 = vmatmul.mubr.f32.gmra.mxu0 1.0
  %v561 = vpop.f32.mrf.mxu0
  %v562 = vadd.f32 0.0, %v561
  %v563 = vpop.f32.mrf.mxu0
  %564 = vdwg.mxu0
  %565 = vmatprep.subr.mxu0 0.0
  %566 = vmatpush1.msra.mxu0 %v233
  %567 = vmatprep.subr.mxu0 0.0
  %568 = vmatpush1.msra.mxu0 %v228
  %569 = vmatprep.subr.mxu0 0.0
  %570 = vmatpush1.msra.mxu0 %v223
  %571 = vmatprep.subr.mxu0 0.0
  %572 = vmatpush1.msra.mxu0 %v218
  %573 = vmatprep.subr.mxu0 0.0
  %574 = vmatpush1.msra.mxu0 %v213
  %575 = vmatprep.subr.mxu0 0.0
  %576 = vmatpush1.msra.mxu0 %v208
  %577 = vmatprep.subr.mxu0 0.0
  %578 = vmatpush1.msra.mxu0 %v203
  %579 = vmatprep.subr.mxu0 0.0
  %580 = vmatpush1.msra.mxu0 %v198
  %581 = vmatprep.subr.mxu0 0.0
  %582 = vmatpush1.msra.mxu0 %v193
  %583 = vmatprep.subr.mxu0 0.0
  %584 = vmatpush1.msra.mxu0 %v188
  %585 = vmatprep.subr.mxu0 0.0
  %586 = vmatpush1.msra.mxu0 %v183
  %587 = vmatprep.subr.mxu0 0.0
  %588 = vmatpush1.msra.mxu0 %v178
  %589 = vmatprep.subr.mxu0 0.0
  %590 = vmatpush1.msra.mxu0 %v173
  %591 = vmatprep.subr.mxu0 0.0
  %592 = vmatpush1.msra.mxu0 %v168
  %593 = vmatprep.subr.mxu0 0.0
  %594 = vmatpush1.msra.mxu0 %v163
  %595 = vmatprep.subr.mxu0 0.0
  %596 = vmatpush1.msra.mxu0 %v158
  %597 = vmatprep.subr.mxu0 0.0
  %598 = vmatpush2.msra.mxu0 0.0
  %599 = vmatprep.subr.mxu0 0.0
  %600 = vmatpush2.msra.mxu0 0.0
  %601 = vmatprep.subr.mxu0 0.0
  %602 = vmatpush2.msra.mxu0 0.0
  %603 = vmatprep.subr.mxu0 0.0
  %604 = vmatpush2.msra.mxu0 0.0
  %605 = vmatprep.subr.mxu0 0.0
  %606 = vmatpush2.msra.mxu0 0.0
  %607 = vmatprep.subr.mxu0 0.0
  %608 = vmatpush2.msra.mxu0 0.0
  %609 = vmatprep.subr.mxu0 0.0
  %610 = vmatpush2.msra.mxu0 0.0
  %611 = vmatprep.subr.mxu0 0.0
  %612 = vmatpush2.msra.mxu0 0.0
  %613 = vmatprep.subr.mxu0 0.0
  %614 = vmatpush2.msra.mxu0 0.0
  %615 = vmatprep.subr.mxu0 0.0
  %616 = vmatpush2.msra.mxu0 0.0
  %617 = vmatprep.subr.mxu0 0.0
  %618 = vmatpush2.msra.mxu0 0.0
  %619 = vmatprep.subr.mxu0 0.0
  %620 = vmatpush2.msra.mxu0 0.0
  %621 = vmatprep.subr.mxu0 0.0
  %622 = vmatpush2.msra.mxu0 0.0
  %623 = vmatprep.subr.mxu0 0.0
  %624 = vmatpush2.msra.mxu0 0.0
  %625 = vmatprep.subr.mxu0 0.0
  %626 = vmatpush2.msra.mxu0 0.0
  %627 = vmatprep.subr.mxu0 0.0
  %628 = vmatpush2.msra.mxu0 0.0
  %629 = vmatprep.mubr.f32.mxu0 0.0
  %630 = vmatmul.mubr.f32.gmra.mxu0 1.0
  %v631 = vpop.f32.mrf.mxu0
  %v632 = vadd.f32 %v562, %v631
  %v633 = vpop.f32.mrf.mxu0
  %634 = vdwg.mxu0
  %v635 = vmul.f32 %v400, %v400
  %v636 = vmul.f32 %v405, %v405
  %v637 = vmul.f32 %v410, %v410
  %v638 = vmul.f32 %v415, %v415
  %v639 = vmul.f32 %v420, %v420
  %v640 = vmul.f32 %v425, %v425
  %v641 = vmul.f32 %v430, %v430
  %v642 = vmul.f32 %v435, %v435
  %v643 = vmul.f32 %v440, %v440
  %v644 = vmul.f32 %v445, %v445
  %v645 = vmul.f32 %v450, %v450
  %v646 = vmul.f32 %v455, %v455
  %v647 = vmul.f32 %v460, %v460
  %v648 = vmul.f32 %v465, %v465
  %v649 = vmul.f32 %v470, %v470
  %v650 = vmul.f32 %v475, %v475
  %651 = vmatprep.subr.mxu0 0.0
  %652 = vmatpush1.msra.mxu0 %v650
  %653 = vmatprep.subr.mxu0 0.0
  %654 = vmatpush1.msra.mxu0 %v649
  %655 = vmatprep.subr.mxu0 0.0
  %656 = vmatpush1.msra.mxu0 %v648
  %657 = vmatprep.subr.mxu0 0.0
  %658 = vmatpush1.msra.mxu0 %v647
  %659 = vmatprep.subr.mxu0 0.0
  %660 = vmatpush1.msra.mxu0 %v646
  %661 = vmatprep.subr.mxu0 0.0
  %662 = vmatpush1.msra.mxu0 %v645
  %663 = vmatprep.subr.mxu0 0.0
  %664 = vmatpush1.msra.mxu0 %v644
  %665 = vmatprep.subr.mxu0 0.0
  %666 = vmatpush1.msra.mxu0 %v643
  %667 = vmatprep.subr.mxu0 0.0
  %668 = vmatpush1.msra.mxu0 %v642
  %669 = vmatprep.subr.mxu0 0.0
  %670 = vmatpush1.msra.mxu0 %v641
  %671 = vmatprep.subr.mxu0 0.0
  %672 = vmatpush1.msra.mxu0 %v640
  %673 = vmatprep.subr.mxu0 0.0
  %674 = vmatpush1.msra.mxu0 %v639
  %675 = vmatprep.subr.mxu0 0.0
  %676 = vmatpush1.msra.mxu0 %v638
  %677 = vmatprep.subr.mxu0 0.0
  %678 = vmatpush1.msra.mxu0 %v637
  %679 = vmatprep.subr.mxu0 0.0
  %680 = vmatpush1.msra.mxu0 %v636
  %681 = vmatprep.subr.mxu0 0.0
  %682 = vmatpush1.msra.mxu0 %v635
  %683 = vmatprep.subr.mxu0 0.0
  %684 = vmatpush2.msra.mxu0 0.0
  %685 = vmatprep.subr.mxu0 0.0
  %686 = vmatpush2.msra.mxu0 0.0
  %687 = vmatprep.subr.mxu0 0.0
  %688 = vmatpush2.msra.mxu0 0.0
  %689 = vmatprep.subr.mxu0 0.0
  %690 = vmatpush2.msra.mxu0 0.0
  %691 = vmatprep.subr.mxu0 0.0
  %692 = vmatpush2.msra.mxu0 0.0
  %693 = vmatprep.subr.mxu0 0.0
  %694 = vmatpush2.msra.mxu0 0.0
  %695 = vmatprep.subr.mxu0 0.0
  %696 = vmatpush2.msra.mxu0 0.0
  %697 = vmatprep.subr.mxu0 0.0
  %698 = vmatpush2.msra.mxu0 0.0
  %699 = vmatprep.subr.mxu0 0.0
  %700 = vmatpush2.msra.mxu0 0.0
  %701 = vmatprep.subr.mxu0 0.0
  %702 = vmatpush2.msra.mxu0 0.0
  %703 = vmatprep.subr.mxu0 0.0
  %704 = vmatpush2.msra.mxu0 0.0
  %705 = vmatprep.subr.mxu0 0.0
  %706 = vmatpush2.msra.mxu0 0.0
  %707 = vmatprep.subr.mxu0 0.0
  %708 = vmatpush2.msra.mxu0 0.0
  %709 = vmatprep.subr.mxu0 0.0
  %710 = vmatpush2.msra.mxu0 0.0
  %711 = vmatprep.subr.mxu0 0.0
  %712 = vmatpush2.msra.mxu0 0.0
  %713 = vmatprep.subr.mxu0 0.0
  %714 = vmatpush2.msra.mxu0 0.0
  %715 = vmatprep.mubr.f32.mxu0 0.0
  %716 = vmatmul.mubr.f32.gmra.mxu0 1.0
  %v717 = vpop.f32.mrf.mxu0
  %v718 = vadd.f32 0.0, %v717
  %v719 = vpop.f32.mrf.mxu0
  %720 = vdwg.mxu0
  %721 = vmatprep.subr.mxu0 0.0
  %722 = vmatpush1.msra.mxu0 %v267
  %723 = vmatprep.subr.mxu0 0.0
  %724 = vmatpush1.msra.mxu0 %v266
  %725 = vmatprep.subr.mxu0 0.0
  %726 = vmatpush1.msra.mxu0 %v265
  %727 = vmatprep.subr.mxu0 0.0
  %728 = vmatpush1.msra.mxu0 %v264
  %729 = vmatprep.subr.mxu0 0.0
  %730 = vmatpush1.msra.mxu0 %v263
  %731 = vmatprep.subr.mxu0 0.0
  %732 = vmatpush1.msra.mxu0 %v262
  %733 = vmatprep.subr.mxu0 0.0
  %734 = vmatpush1.msra.mxu0 %v261
  %735 = vmatprep.subr.mxu0 0.0
  %736 = vmatpush1.msra.mxu0 %v260
  %737 = vmatprep.subr.mxu0 0.0
  %738 = vmatpush1.msra.mxu0 %v259
  %739 = vmatprep.subr.mxu0 0.0
  %740 = vmatpush1.msra.mxu0 %v258
  %741 = vmatprep.subr.mxu0 0.0
  %742 = vmatpush1.msra.mxu0 %v257
  %743 = vmatprep.subr.mxu0 0.0
  %744 = vmatpush1.msra.mxu0 %v256
  %745 = vmatprep.subr.mxu0 0.0
  %746 = vmatpush1.msra.mxu0 %v255
  %747 = vmatprep.subr.mxu0 0.0
  %748 = vmatpush1.msra.mxu0 %v254
  %749 = vmatprep.subr.mxu0 0.0
  %750 = vmatpush1.msra.mxu0 %v253
  %751 = vmatprep.subr.mxu0 0.0
  %752 = vmatpush1.msra.mxu0 %v252
  %753 = vmatprep.subr.mxu0 0.0
  %754 = vmatpush2.msra.mxu0 0.0
  %755 = vmatprep.subr.mxu0 0.0
  %756 = vmatpush2.msra.mxu0 0.0
  %757 = vmatprep.subr.mxu0 0.0
  %758 = vmatpush2.msra.mxu0 0.0
  %759 = vmatprep.subr.mxu0 0.0
  %760 = vmatpush2.msra.mxu0 0.0
  %761 = vmatprep.subr.mxu0 0.0
  %762 = vmatpush2.msra.mxu0 0.0
  %763 = vmatprep.subr.mxu0 0.0
  %764 = vmatpush2.msra.mxu0 0.0
  %765 = vmatprep.subr.mxu0 0.0
  %766 = vmatpush2.msra.mxu0 0.0
  %767 = vmatprep.subr.mxu0 0.0
  %768 = vmatpush2.msra.mxu0 0.0
  %769 = vmatprep.subr.mxu0 0.0
  %770 = vmatpush2.msra.mxu0 0.0
  %771 = vmatprep.subr.mxu0 0.0
  %772 = vmatpush2.msra.mxu0 0.0
  %773 = vmatprep.subr.mxu0 0.0
  %774 = vmatpush2.msra.mxu0 0.0
  %775 = vmatprep.subr.mxu0 0.0
  %776 = vmatpush2.msra.mxu0 0.0
  %777 = vmatprep.subr.mxu0 0.0
  %778 = vmatpush2.msra.mxu0 0.0
  %779 = vmatprep.subr.mxu0 0.0
  %780 = vmatpush2.msra.mxu0 0.0
  %781 = vmatprep.subr.mxu0 0.0
  %782 = vmatpush2.msra.mxu0 0.0
  %783 = vmatprep.subr.mxu0 0.0
  %784 = vmatpush2.msra.mxu0 0.0
  %785 = vmatprep.mubr.f32.mxu0 0.0
  %786 = vmatmul.mubr.f32.gmra.mxu0 1.0
  %v787 = vpop.f32.mrf.mxu0
  %v788 = vadd.f32 %v718, %v787
  %v789 = vpop.f32.mrf.mxu0
  %790 = vdwg.mxu0
  %s791 = scalar_lea.vmem %s0, 256
  %v792 = vld [vmem:[%s791] sm:$0xff]
  %v793 = vld [vmem:[%s791 + $0x8] sm:$0xff]
  %v794 = vld [vmem:[%s791 + $0x10] sm:$0xff]
  %v795 = vld [vmem:[%s791 + $0x18] sm:$0xff]
  %v796 = vld [vmem:[%s791 + $0x20] sm:$0xff]
  %v797 = vld [vmem:[%s791 + $0x28] sm:$0xff]
  %v798 = vld [vmem:[%s791 + $0x30] sm:$0xff]
  %v799 = vld [vmem:[%s791 + $0x38] sm:$0xff]
  %v800 = vld [vmem:[%s791 + $0x40] sm:$0xff]
  %v801 = vld [vmem:[%s791 + $0x48] sm:$0xff]
  %v802 = vld [vmem:[%s791 + $0x50] sm:$0xff]
  %v803 = vld [vmem:[%s791 + $0x58] sm:$0xff]
  %v804 = vld [vmem:[%s791 + $0x60] sm:$0xff]
  %v805 = vld [vmem:[%s791 + $0x68] sm:$0xff]
  %v806 = vld [vmem:[%s791 + $0x70] sm:$0xff]
  %v807 = vld [vmem:[%s791 + $0x78] sm:$0xff]
  %v809 = vsel %vm38, %v792, 0
  %v812 = vsel %vm38, %v793, 0
  %v815 = vsel %vm38, %v794, 0
  %v818 = vsel %vm38, %v795, 0
  %v821 = vsel %vm38, %v796, 0
  %v824 = vsel %vm38, %v797, 0
  %v827 = vsel %vm38, %v798, 0
  %v830 = vsel %vm38, %v799, 0
  %v833 = vsel %vm38, %v800, 0
  %v836 = vsel %vm38, %v801, 0
  %v839 = vsel %vm38, %v802, 0
  %v842 = vsel %vm38, %v803, 0
  %v845 = vsel %vm38, %v804, 0
  %v848 = vsel %vm38, %v805, 0
  %v851 = vsel %vm38, %v806, 0
  %v854 = vsel %vm38, %v807, 0
  %856 = vmatprep.subr.mxu0 0.0
  %857 = vmatpush1.msra.mxu0 0.0
  %858 = vmatprep.subr.mxu0 0.0
  %859 = vmatpush1.msra.mxu0 0.0
  %860 = vmatprep.subr.mxu0 0.0
  %861 = vmatpush1.msra.mxu0 0.0
  %862 = vmatprep.subr.mxu0 0.0
  %863 = vmatpush1.msra.mxu0 0.0
  %864 = vmatprep.subr.mxu0 0.0
  %865 = vmatpush1.msra.mxu0 0.0
  %866 = vmatprep.subr.mxu0 0.0
  %867 = vmatpush1.msra.mxu0 0.0
  %868 = vmatprep.subr.mxu0 0.0
  %869 = vmatpush1.msra.mxu0 0.0
  %870 = vmatprep.subr.mxu0 0.0
  %871 = vmatpush1.msra.mxu0 0.0
  %872 = vmatprep.subr.mxu0 0.0
  %873 = vmatpush1.msra.mxu0 0.0
  %874 = vmatprep.subr.mxu0 0.0
  %875 = vmatpush1.msra.mxu0 0.0
  %876 = vmatprep.subr.mxu0 0.0
  %877 = vmatpush1.msra.mxu0 0.0
  %878 = vmatprep.subr.mxu0 0.0
  %879 = vmatpush1.msra.mxu0 %v89
  %880 = vmatprep.subr.mxu0 0.0
  %881 = vmatpush1.msra.mxu0 %v20
  %882 = vmatprep.subr.mxu0 0.0
  %883 = vmatpush1.msra.mxu0 %v19
  %884 = vmatprep.subr.mxu0 0.0
  %885 = vmatpush1.msra.mxu0 %v18
  %886 = vmatprep.subr.mxu0 0.0
  %887 = vmatpush1.msra.mxu0 %v17
  %888 = vmatprep.subr.mxu0 0.0
  %889 = vmatpush2.msra.mxu0 0.0
  %890 = vmatprep.subr.mxu0 0.0
  %891 = vmatpush2.msra.mxu0 0.0
  %892 = vmatprep.subr.mxu0 0.0
  %893 = vmatpush2.msra.mxu0 0.0
  %894 = vmatprep.subr.mxu0 0.0
  %895 = vmatpush2.msra.mxu0 0.0
  %896 = vmatprep.subr.mxu0 0.0
  %897 = vmatpush2.msra.mxu0 0.0
  %898 = vmatprep.subr.mxu0 0.0
  %899 = vmatpush2.msra.mxu0 0.0
  %900 = vmatprep.subr.mxu0 0.0
  %901 = vmatpush2.msra.mxu0 0.0
  %902 = vmatprep.subr.mxu0 0.0
  %903 = vmatpush2.msra.mxu0 0.0
  %904 = vmatprep.subr.mxu0 0.0
  %905 = vmatpush2.msra.mxu0 0.0
  %906 = vmatprep.subr.mxu0 0.0
  %907 = vmatpush2.msra.mxu0 0.0
  %908 = vmatprep.subr.mxu0 0.0
  %909 = vmatpush2.msra.mxu0 0.0
  %910 = vmatprep.subr.mxu0 0.0
  %911 = vmatpush2.msra.mxu0 0.0
  %912 = vmatprep.subr.mxu0 0.0
  %913 = vmatpush2.msra.mxu0 0.0
  %914 = vmatprep.subr.mxu0 0.0
  %915 = vmatpush2.msra.mxu0 0.0
  %916 = vmatprep.subr.mxu0 0.0
  %917 = vmatpush2.msra.mxu0 0.0
  %918 = vmatprep.subr.mxu0 0.0
  %919 = vmatpush2.msra.mxu0 0.0
  %920 = vmatprep.mubr.f32.mxu0 0.0
  %921 = vmatmul.mubr.f32.gmra.mxu0 %v809
  %v922 = vpop.f32.mrf.mxu0
  %v923 = vadd.f32 0.0, %v922
  %v924 = vpop.f32.mrf.mxu0
  %925 = vmatprep.mubr.f32.mxu0 0.0
  %926 = vmatmul.mubr.f32.gmra.mxu0 %v812
  %v927 = vpop.f32.mrf.mxu0
  %v928 = vadd.f32 0.0, %v927
  %v929 = vpop.f32.mrf.mxu0
  %930 = vmatprep.mubr.f32.mxu0 0.0
  %931 = vmatmul.mubr.f32.gmra.mxu0 %v815
  %v932 = vpop.f32.mrf.mxu0
  %v933 = vadd.f32 0.0, %v932
  %v934 = vpop.f32.mrf.mxu0
  %935 = vmatprep.mubr.f32.mxu0 0.0
  %936 = vmatmul.mubr.f32.gmra.mxu0 %v818
  %v937 = vpop.f32.mrf.mxu0
  %v938 = vadd.f32 0.0, %v937
  %v939 = vpop.f32.mrf.mxu0
  %940 = vmatprep.mubr.f32.mxu0 0.0
  %941 = vmatmul.mubr.f32.gmra.mxu0 %v821
  %v942 = vpop.f32.mrf.mxu0
  %v943 = vadd.f32 0.0, %v942
  %v944 = vpop.f32.mrf.mxu0
  %945 = vmatprep.mubr.f32.mxu0 0.0
  %946 = vmatmul.mubr.f32.gmra.mxu0 %v824
  %v947 = vpop.f32.mrf.mxu0
  %v948 = vadd.f32 0.0, %v947
  %v949 = vpop.f32.mrf.mxu0
  %950 = vmatprep.mubr.f32.mxu0 0.0
  %951 = vmatmul.mubr.f32.gmra.mxu0 %v827
  %v952 = vpop.f32.mrf.mxu0
  %v953 = vadd.f32 0.0, %v952
  %v954 = vpop.f32.mrf.mxu0
  %955 = vmatprep.mubr.f32.mxu0 0.0
  %956 = vmatmul.mubr.f32.gmra.mxu0 %v830
  %v957 = vpop.f32.mrf.mxu0
  %v958 = vadd.f32 0.0, %v957
  %v959 = vpop.f32.mrf.mxu0
  %960 = vmatprep.mubr.f32.mxu0 0.0
  %961 = vmatmul.mubr.f32.gmra.mxu0 %v833
  %v962 = vpop.f32.mrf.mxu0
  %v963 = vadd.f32 0.0, %v962
  %v964 = vpop.f32.mrf.mxu0
  %965 = vmatprep.mubr.f32.mxu0 0.0
  %966 = vmatmul.mubr.f32.gmra.mxu0 %v836
  %v967 = vpop.f32.mrf.mxu0
  %v968 = vadd.f32 0.0, %v967
  %v969 = vpop.f32.mrf.mxu0
  %970 = vmatprep.mubr.f32.mxu0 0.0
  %971 = vmatmul.mubr.f32.gmra.mxu0 %v839
  %v972 = vpop.f32.mrf.mxu0
  %v973 = vadd.f32 0.0, %v972
  %v974 = vpop.f32.mrf.mxu0
  %975 = vmatprep.mubr.f32.mxu0 0.0
  %976 = vmatmul.mubr.f32.gmra.mxu0 %v842
  %v977 = vpop.f32.mrf.mxu0
  %v978 = vadd.f32 0.0, %v977
  %v979 = vpop.f32.mrf.mxu0
  %980 = vmatprep.mubr.f32.mxu0 0.0
  %981 = vmatmul.mubr.f32.gmra.mxu0 %v845
  %v982 = vpop.f32.mrf.mxu0
  %v983 = vadd.f32 0.0, %v982
  %v984 = vpop.f32.mrf.mxu0
  %985 = vmatprep.mubr.f32.mxu0 0.0
  %986 = vmatmul.mubr.f32.gmra.mxu0 %v848
  %v987 = vpop.f32.mrf.mxu0
  %v988 = vadd.f32 0.0, %v987
  %v989 = vpop.f32.mrf.mxu0
  %990 = vmatprep.mubr.f32.mxu0 0.0
  %991 = vmatmul.mubr.f32.gmra.mxu0 %v851
  %v992 = vpop.f32.mrf.mxu0
  %v993 = vadd.f32 0.0, %v992
  %v994 = vpop.f32.mrf.mxu0
  %995 = vmatprep.mubr.f32.mxu0 0.0
  %996 = vmatmul.mubr.f32.gmra.mxu0 %v854
  %v997 = vpop.f32.mrf.mxu0
  %v998 = vadd.f32 0.0, %v997
  %v999 = vpop.f32.mrf.mxu0
  %1000 = vdwg.mxu0
  %s1001 = scalar_lea.vmem %s4, 256
  %1002 = vst [vmem:[%s1001] sm:$0xff] %v923
  %1003 = vst [vmem:[%s1001 + $0x8] sm:$0xff] %v928
  %1004 = vst [vmem:[%s1001 + $0x10] sm:$0xff] %v933
  %1005 = vst [vmem:[%s1001 + $0x18] sm:$0xff] %v938
  %1006 = vst [vmem:[%s1001 + $0x20] sm:$0xff] %v943
  %1007 = vst [vmem:[%s1001 + $0x28] sm:$0xff] %v948
  %1008 = vst [vmem:[%s1001 + $0x30] sm:$0xff] %v953
  %1009 = vst [vmem:[%s1001 + $0x38] sm:$0xff] %v958
  %1010 = vst [vmem:[%s1001 + $0x40] sm:$0xff] %v963
  %1011 = vst [vmem:[%s1001 + $0x48] sm:$0xff] %v968
  %1012 = vst [vmem:[%s1001 + $0x50] sm:$0xff] %v973
  %1013 = vst [vmem:[%s1001 + $0x58] sm:$0xff] %v978
  %1014 = vst [vmem:[%s1001 + $0x60] sm:$0xff] %v983
  %1015 = vst [vmem:[%s1001 + $0x68] sm:$0xff] %v988
  %1016 = vst [vmem:[%s1001 + $0x70] sm:$0xff] %v993
  %1017 = vst [vmem:[%s1001 + $0x78] sm:$0xff] %v998
  %1018 = vmatprep.subr.mxu0 0.0
  %1019 = vmatpush1.msra.mxu0 %v998
  %1020 = vmatprep.subr.mxu0 0.0
  %1021 = vmatpush1.msra.mxu0 %v993
  %1022 = vmatprep.subr.mxu0 0.0
  %1023 = vmatpush1.msra.mxu0 %v988
  %1024 = vmatprep.subr.mxu0 0.0
  %1025 = vmatpush1.msra.mxu0 %v983
  %1026 = vmatprep.subr.mxu0 0.0
  %1027 = vmatpush1.msra.mxu0 %v978
  %1028 = vmatprep.subr.mxu0 0.0
  %1029 = vmatpush1.msra.mxu0 %v973
  %1030 = vmatprep.subr.mxu0 0.0
  %1031 = vmatpush1.msra.mxu0 %v968
  %1032 = vmatprep.subr.mxu0 0.0
  %1033 = vmatpush1.msra.mxu0 %v963
  %1034 = vmatprep.subr.mxu0 0.0
  %1035 = vmatpush1.msra.mxu0 %v958
  %1036 = vmatprep.subr.mxu0 0.0
  %1037 = vmatpush1.msra.mxu0 %v953
  %1038 = vmatprep.subr.mxu0 0.0
  %1039 = vmatpush1.msra.mxu0 %v948
  %1040 = vmatprep.subr.mxu0 0.0
  %1041 = vmatpush1.msra.mxu0 %v943
  %1042 = vmatprep.subr.mxu0 0.0
  %1043 = vmatpush1.msra.mxu0 %v938
  %1044 = vmatprep.subr.mxu0 0.0
  %1045 = vmatpush1.msra.mxu0 %v933
  %1046 = vmatprep.subr.mxu0 0.0
  %1047 = vmatpush1.msra.mxu0 %v928
  %1048 = vmatprep.subr.mxu0 0.0
  %1049 = vmatpush1.msra.mxu0 %v923
  %1050 = vmatprep.subr.mxu0 0.0
  %1051 = vmatpush2.msra.mxu0 0.0
  %1052 = vmatprep.subr.mxu0 0.0
  %1053 = vmatpush2.msra.mxu0 0.0
  %1054 = vmatprep.subr.mxu0 0.0
  %1055 = vmatpush2.msra.mxu0 0.0
  %1056 = vmatprep.subr.mxu0 0.0
  %1057 = vmatpush2.msra.mxu0 0.0
  %1058 = vmatprep.subr.mxu0 0.0
  %1059 = vmatpush2.msra.mxu0 0.0
  %1060 = vmatprep.subr.mxu0 0.0
  %1061 = vmatpush2.msra.mxu0 0.0
  %1062 = vmatprep.subr.mxu0 0.0
  %1063 = vmatpush2.msra.mxu0 0.0
  %1064 = vmatprep.subr.mxu0 0.0
  %1065 = vmatpush2.msra.mxu0 0.0
  %1066 = vmatprep.subr.mxu0 0.0
  %1067 = vmatpush2.msra.mxu0 0.0
  %1068 = vmatprep.subr.mxu0 0.0
  %1069 = vmatpush2.msra.mxu0 0.0
  %1070 = vmatprep.subr.mxu0 0.0
  %1071 = vmatpush2.msra.mxu0 0.0
  %1072 = vmatprep.subr.mxu0 0.0
  %1073 = vmatpush2.msra.mxu0 0.0
  %1074 = vmatprep.subr.mxu0 0.0
  %1075 = vmatpush2.msra.mxu0 0.0
  %1076 = vmatprep.subr.mxu0 0.0
  %1077 = vmatpush2.msra.mxu0 0.0
  %1078 = vmatprep.subr.mxu0 0.0
  %1079 = vmatpush2.msra.mxu0 0.0
  %1080 = vmatprep.subr.mxu0 0.0
  %1081 = vmatpush2.msra.mxu0 0.0
  %1082 = vmatprep.mubr.f32.mxu0 0.0
  %1083 = vmatmul.mubr.f32.gmra.mxu0 1.0
  %v1084 = vpop.f32.mrf.mxu0
  %v1085 = vadd.f32 0.0, %v1084
  %v1086 = vpop.f32.mrf.mxu0
  %1087 = vdwg.mxu0
  %v1088 = vadd.f32 %v632, %v1085
  %v1089 = vmul.f32 %v923, %v923
  %v1090 = vmul.f32 %v928, %v928
  %v1091 = vmul.f32 %v933, %v933
  %v1092 = vmul.f32 %v938, %v938
  %v1093 = vmul.f32 %v943, %v943
  %v1094 = vmul.f32 %v948, %v948
  %v1095 = vmul.f32 %v953, %v953
  %v1096 = vmul.f32 %v958, %v958
  %v1097 = vmul.f32 %v963, %v963
  %v1098 = vmul.f32 %v968, %v968
  %v1099 = vmul.f32 %v973, %v973
  %v1100 = vmul.f32 %v978, %v978
  %v1101 = vmul.f32 %v983, %v983
  %v1102 = vmul.f32 %v988, %v988
  %v1103 = vmul.f32 %v993, %v993
  %v1104 = vmul.f32 %v998, %v998
  %1105 = vmatprep.subr.mxu0 0.0
  %1106 = vmatpush1.msra.mxu0 %v1104
  %1107 = vmatprep.subr.mxu0 0.0
  %1108 = vmatpush1.msra.mxu0 %v1103
  %1109 = vmatprep.subr.mxu0 0.0
  %1110 = vmatpush1.msra.mxu0 %v1102
  %1111 = vmatprep.subr.mxu0 0.0
  %1112 = vmatpush1.msra.mxu0 %v1101
  %1113 = vmatprep.subr.mxu0 0.0
  %1114 = vmatpush1.msra.mxu0 %v1100
  %1115 = vmatprep.subr.mxu0 0.0
  %1116 = vmatpush1.msra.mxu0 %v1099
  %1117 = vmatprep.subr.mxu0 0.0
  %1118 = vmatpush1.msra.mxu0 %v1098
  %1119 = vmatprep.subr.mxu0 0.0
  %1120 = vmatpush1.msra.mxu0 %v1097
  %1121 = vmatprep.subr.mxu0 0.0
  %1122 = vmatpush1.msra.mxu0 %v1096
  %1123 = vmatprep.subr.mxu0 0.0
  %1124 = vmatpush1.msra.mxu0 %v1095
  %1125 = vmatprep.subr.mxu0 0.0
  %1126 = vmatpush1.msra.mxu0 %v1094
  %1127 = vmatprep.subr.mxu0 0.0
  %1128 = vmatpush1.msra.mxu0 %v1093
  %1129 = vmatprep.subr.mxu0 0.0
  %1130 = vmatpush1.msra.mxu0 %v1092
  %1131 = vmatprep.subr.mxu0 0.0
  %1132 = vmatpush1.msra.mxu0 %v1091
  %1133 = vmatprep.subr.mxu0 0.0
  %1134 = vmatpush1.msra.mxu0 %v1090
  %1135 = vmatprep.subr.mxu0 0.0
  %1136 = vmatpush1.msra.mxu0 %v1089
  %1137 = vmatprep.subr.mxu0 0.0
  %1138 = vmatpush2.msra.mxu0 0.0
  %1139 = vmatprep.subr.mxu0 0.0
  %1140 = vmatpush2.msra.mxu0 0.0
  %1141 = vmatprep.subr.mxu0 0.0
  %1142 = vmatpush2.msra.mxu0 0.0
  %1143 = vmatprep.subr.mxu0 0.0
  %1144 = vmatpush2.msra.mxu0 0.0
  %1145 = vmatprep.subr.mxu0 0.0
  %1146 = vmatpush2.msra.mxu0 0.0
  %1147 = vmatprep.subr.mxu0 0.0
  %1148 = vmatpush2.msra.mxu0 0.0
  %1149 = vmatprep.subr.mxu0 0.0
  %1150 = vmatpush2.msra.mxu0 0.0
  %1151 = vmatprep.subr.mxu0 0.0
  %1152 = vmatpush2.msra.mxu0 0.0
  %1153 = vmatprep.subr.mxu0 0.0
  %1154 = vmatpush2.msra.mxu0 0.0
  %1155 = vmatprep.subr.mxu0 0.0
  %1156 = vmatpush2.msra.mxu0 0.0
  %1157 = vmatprep.subr.mxu0 0.0
  %1158 = vmatpush2.msra.mxu0 0.0
  %1159 = vmatprep.subr.mxu0 0.0
  %1160 = vmatpush2.msra.mxu0 0.0
  %1161 = vmatprep.subr.mxu0 0.0
  %1162 = vmatpush2.msra.mxu0 0.0
  %1163 = vmatprep.subr.mxu0 0.0
  %1164 = vmatpush2.msra.mxu0 0.0
  %1165 = vmatprep.subr.mxu0 0.0
  %1166 = vmatpush2.msra.mxu0 0.0
  %1167 = vmatprep.subr.mxu0 0.0
  %1168 = vmatpush2.msra.mxu0 0.0
  %1169 = vmatprep.mubr.f32.mxu0 0.0
  %1170 = vmatmul.mubr.f32.gmra.mxu0 1.0
  %v1171 = vpop.f32.mrf.mxu0
  %v1172 = vadd.f32 0.0, %v1171
  %v1173 = vpop.f32.mrf.mxu0
  %1174 = vdwg.mxu0
  %v1175 = vadd.f32 %v788, %v1172
  %s1176 = scalar_lea.vmem %s0, 384
  %v1177 = vld [vmem:[%s1176] sm:$0xff]
  %v1178 = vld [vmem:[%s1176 + $0x8] sm:$0xff]
  %v1179 = vld [vmem:[%s1176 + $0x10] sm:$0xff]
  %v1180 = vld [vmem:[%s1176 + $0x18] sm:$0xff]
  %v1181 = vld [vmem:[%s1176 + $0x20] sm:$0xff]
  %v1182 = vld [vmem:[%s1176 + $0x28] sm:$0xff]
  %v1183 = vld [vmem:[%s1176 + $0x30] sm:$0xff]
  %v1184 = vld [vmem:[%s1176 + $0x38] sm:$0xff]
  %v1185 = vld [vmem:[%s1176 + $0x40] sm:$0xff]
  %v1186 = vld [vmem:[%s1176 + $0x48] sm:$0xff]
  %v1187 = vld [vmem:[%s1176 + $0x50] sm:$0xff]
  %v1188 = vld [vmem:[%s1176 + $0x58] sm:$0xff]
  %v1189 = vld [vmem:[%s1176 + $0x60] sm:$0xff]
  %v1190 = vld [vmem:[%s1176 + $0x68] sm:$0xff]
  %v1191 = vld [vmem:[%s1176 + $0x70] sm:$0xff]
  %v1192 = vld [vmem:[%s1176 + $0x78] sm:$0xff]
  %v1194 = vsel %vm38, %v1177, 0
  %v1197 = vsel %vm38, %v1178, 0
  %v1200 = vsel %vm38, %v1179, 0
  %v1203 = vsel %vm38, %v1180, 0
  %v1206 = vsel %vm38, %v1181, 0
  %v1209 = vsel %vm38, %v1182, 0
  %v1212 = vsel %vm38, %v1183, 0
  %v1215 = vsel %vm38, %v1184, 0
  %v1218 = vsel %vm38, %v1185, 0
  %v1221 = vsel %vm38, %v1186, 0
  %v1224 = vsel %vm38, %v1187, 0
  %v1227 = vsel %vm38, %v1188, 0
  %v1230 = vsel %vm38, %v1189, 0
  %v1233 = vsel %vm38, %v1190, 0
  %v1236 = vsel %vm38, %v1191, 0
  %v1239 = vsel %vm38, %v1192, 0
  %1241 = vmatprep.subr.mxu0 0.0
  %1242 = vmatpush1.msra.mxu0 0.0
  %1243 = vmatprep.subr.mxu0 0.0
  %1244 = vmatpush1.msra.mxu0 0.0
  %1245 = vmatprep.subr.mxu0 0.0
  %1246 = vmatpush1.msra.mxu0 0.0
  %1247 = vmatprep.subr.mxu0 0.0
  %1248 = vmatpush1.msra.mxu0 0.0
  %1249 = vmatprep.subr.mxu0 0.0
  %1250 = vmatpush1.msra.mxu0 0.0
  %1251 = vmatprep.subr.mxu0 0.0
  %1252 = vmatpush1.msra.mxu0 0.0
  %1253 = vmatprep.subr.mxu0 0.0
  %1254 = vmatpush1.msra.mxu0 0.0
  %1255 = vmatprep.subr.mxu0 0.0
  %1256 = vmatpush1.msra.mxu0 0.0
  %1257 = vmatprep.subr.mxu0 0.0
  %1258 = vmatpush1.msra.mxu0 0.0
  %1259 = vmatprep.subr.mxu0 0.0
  %1260 = vmatpush1.msra.mxu0 0.0
  %1261 = vmatprep.subr.mxu0 0.0
  %1262 = vmatpush1.msra.mxu0 0.0
  %1263 = vmatprep.subr.mxu0 0.0
  %1264 = vmatpush1.msra.mxu0 %v89
  %1265 = vmatprep.subr.mxu0 0.0
  %1266 = vmatpush1.msra.mxu0 %v20
  %1267 = vmatprep.subr.mxu0 0.0
  %1268 = vmatpush1.msra.mxu0 %v19
  %1269 = vmatprep.subr.mxu0 0.0
  %1270 = vmatpush1.msra.mxu0 %v18
  %1271 = vmatprep.subr.mxu0 0.0
  %1272 = vmatpush1.msra.mxu0 %v17
  %1273 = vmatprep.subr.mxu0 0.0
  %1274 = vmatpush2.msra.mxu0 0.0
  %1275 = vmatprep.subr.mxu0 0.0
  %1276 = vmatpush2.msra.mxu0 0.0
  %1277 = vmatprep.subr.mxu0 0.0
  %1278 = vmatpush2.msra.mxu0 0.0
  %1279 = vmatprep.subr.mxu0 0.0
  %1280 = vmatpush2.msra.mxu0 0.0
  %1281 = vmatprep.subr.mxu0 0.0
  %1282 = vmatpush2.msra.mxu0 0.0
  %1283 = vmatprep.subr.mxu0 0.0
  %1284 = vmatpush2.msra.mxu0 0.0
  %1285 = vmatprep.subr.mxu0 0.0
  %1286 = vmatpush2.msra.mxu0 0.0
  %1287 = vmatprep.subr.mxu0 0.0
  %1288 = vmatpush2.msra.mxu0 0.0
  %1289 = vmatprep.subr.mxu0 0.0
  %1290 = vmatpush2.msra.mxu0 0.0
  %1291 = vmatprep.subr.mxu0 0.0
  %1292 = vmatpush2.msra.mxu0 0.0
  %1293 = vmatprep.subr.mxu0 0.0
  %1294 = vmatpush2.msra.mxu0 0.0
  %1295 = vmatprep.subr.mxu0 0.0
  %1296 = vmatpush2.msra.mxu0 0.0
  %1297 = vmatprep.subr.mxu0 0.0
  %1298 = vmatpush2.msra.mxu0 0.0
  %1299 = vmatprep.subr.mxu0 0.0
  %1300 = vmatpush2.msra.mxu0 0.0
  %1301 = vmatprep.subr.mxu0 0.0
  %1302 = vmatpush2.msra.mxu0 0.0
  %1303 = vmatprep.subr.mxu0 0.0
  %1304 = vmatpush2.msra.mxu0 0.0
  %1305 = vmatprep.mubr.f32.mxu0 0.0
  %1306 = vmatmul.mubr.f32.gmra.mxu0 %v1194
  %v1307 = vpop.f32.mrf.mxu0
  %v1308 = vadd.f32 0.0, %v1307
  %v1309 = vpop.f32.mrf.mxu0
  %1310 = vmatprep.mubr.f32.mxu0 0.0
  %1311 = vmatmul.mubr.f32.gmra.mxu0 %v1197
  %v1312 = vpop.f32.mrf.mxu0
  %v1313 = vadd.f32 0.0, %v1312
  %v1314 = vpop.f32.mrf.mxu0
  %1315 = vmatprep.mubr.f32.mxu0 0.0
  %1316 = vmatmul.mubr.f32.gmra.mxu0 %v1200
  %v1317 = vpop.f32.mrf.mxu0
  %v1318 = vadd.f32 0.0, %v1317
  %v1319 = vpop.f32.mrf.mxu0
  %1320 = vmatprep.mubr.f32.mxu0 0.0
  %1321 = vmatmul.mubr.f32.gmra.mxu0 %v1203
  %v1322 = vpop.f32.mrf.mxu0
  %v1323 = vadd.f32 0.0, %v1322
  %v1324 = vpop.f32.mrf.mxu0
  %1325 = vmatprep.mubr.f32.mxu0 0.0
  %1326 = vmatmul.mubr.f32.gmra.mxu0 %v1206
  %v1327 = vpop.f32.mrf.mxu0
  %v1328 = vadd.f32 0.0, %v1327
  %v1329 = vpop.f32.mrf.mxu0
  %1330 = vmatprep.mubr.f32.mxu0 0.0
  %1331 = vmatmul.mubr.f32.gmra.mxu0 %v1209
  %v1332 = vpop.f32.mrf.mxu0
  %v1333 = vadd.f32 0.0, %v1332
  %v1334 = vpop.f32.mrf.mxu0
  %1335 = vmatprep.mubr.f32.mxu0 0.0
  %1336 = vmatmul.mubr.f32.gmra.mxu0 %v1212
  %v1337 = vpop.f32.mrf.mxu0
  %v1338 = vadd.f32 0.0, %v1337
  %v1339 = vpop.f32.mrf.mxu0
  %1340 = vmatprep.mubr.f32.mxu0 0.0
  %1341 = vmatmul.mubr.f32.gmra.mxu0 %v1215
  %v1342 = vpop.f32.mrf.mxu0
  %v1343 = vadd.f32 0.0, %v1342
  %v1344 = vpop.f32.mrf.mxu0
  %1345 = vmatprep.mubr.f32.mxu0 0.0
  %1346 = vmatmul.mubr.f32.gmra.mxu0 %v1218
  %v1347 = vpop.f32.mrf.mxu0
  %v1348 = vadd.f32 0.0, %v1347
  %v1349 = vpop.f32.mrf.mxu0
  %1350 = vmatprep.mubr.f32.mxu0 0.0
  %1351 = vmatmul.mubr.f32.gmra.mxu0 %v1221
  %v1352 = vpop.f32.mrf.mxu0
  %v1353 = vadd.f32 0.0, %v1352
  %v1354 = vpop.f32.mrf.mxu0
  %1355 = vmatprep.mubr.f32.mxu0 0.0
  %1356 = vmatmul.mubr.f32.gmra.mxu0 %v1224
  %v1357 = vpop.f32.mrf.mxu0
  %v1358 = vadd.f32 0.0, %v1357
  %v1359 = vpop.f32.mrf.mxu0
  %1360 = vmatprep.mubr.f32.mxu0 0.0
  %1361 = vmatmul.mubr.f32.gmra.mxu0 %v1227
  %v1362 = vpop.f32.mrf.mxu0
  %v1363 = vadd.f32 0.0, %v1362
  %v1364 = vpop.f32.mrf.mxu0
  %1365 = vmatprep.mubr.f32.mxu0 0.0
  %1366 = vmatmul.mubr.f32.gmra.mxu0 %v1230
  %v1367 = vpop.f32.mrf.mxu0
  %v1368 = vadd.f32 0.0, %v1367
  %v1369 = vpop.f32.mrf.mxu0
  %1370 = vmatprep.mubr.f32.mxu0 0.0
  %1371 = vmatmul.mubr.f32.gmra.mxu0 %v1233
  %v1372 = vpop.f32.mrf.mxu0
  %v1373 = vadd.f32 0.0, %v1372
  %v1374 = vpop.f32.mrf.mxu0
  %1375 = vmatprep.mubr.f32.mxu0 0.0
  %1376 = vmatmul.mubr.f32.gmra.mxu0 %v1236
  %v1377 = vpop.f32.mrf.mxu0
  %v1378 = vadd.f32 0.0, %v1377
  %v1379 = vpop.f32.mrf.mxu0
  %1380 = vmatprep.mubr.f32.mxu0 0.0
  %1381 = vmatmul.mubr.f32.gmra.mxu0 %v1239
  %v1382 = vpop.f32.mrf.mxu0
  %v1383 = vadd.f32 0.0, %v1382
  %v1384 = vpop.f32.mrf.mxu0
  %1385 = vdwg.mxu0
  %s1386 = scalar_lea.vmem %s4, 384
  %1387 = vst [vmem:[%s1386] sm:$0xff] %v1308
  %1388 = vst [vmem:[%s1386 + $0x8] sm:$0xff] %v1313
  %1389 = vst [vmem:[%s1386 + $0x10] sm:$0xff] %v1318
  %1390 = vst [vmem:[%s1386 + $0x18] sm:$0xff] %v1323
  %1391 = vst [vmem:[%s1386 + $0x20] sm:$0xff] %v1328
  %1392 = vst [vmem:[%s1386 + $0x28] sm:$0xff] %v1333
  %1393 = vst [vmem:[%s1386 + $0x30] sm:$0xff] %v1338
  %1394 = vst [vmem:[%s1386 + $0x38] sm:$0xff] %v1343
  %1395 = vst [vmem:[%s1386 + $0x40] sm:$0xff] %v1348
  %1396 = vst [vmem:[%s1386 + $0x48] sm:$0xff] %v1353
  %1397 = vst [vmem:[%s1386 + $0x50] sm:$0xff] %v1358
  %1398 = vst [vmem:[%s1386 + $0x58] sm:$0xff] %v1363
  %1399 = vst [vmem:[%s1386 + $0x60] sm:$0xff] %v1368
  %1400 = vst [vmem:[%s1386 + $0x68] sm:$0xff] %v1373
  %1401 = vst [vmem:[%s1386 + $0x70] sm:$0xff] %v1378
  %1402 = vst [vmem:[%s1386 + $0x78] sm:$0xff] %v1383
  %1403 = vmatprep.subr.mxu0 0.0
  %1404 = vmatpush1.msra.mxu0 %v1383
  %1405 = vmatprep.subr.mxu0 0.0
  %1406 = vmatpush1.msra.mxu0 %v1378
  %1407 = vmatprep.subr.mxu0 0.0
  %1408 = vmatpush1.msra.mxu0 %v1373
  %1409 = vmatprep.subr.mxu0 0.0
  %1410 = vmatpush1.msra.mxu0 %v1368
  %1411 = vmatprep.subr.mxu0 0.0
  %1412 = vmatpush1.msra.mxu0 %v1363
  %1413 = vmatprep.subr.mxu0 0.0
  %1414 = vmatpush1.msra.mxu0 %v1358
  %1415 = vmatprep.subr.mxu0 0.0
  %1416 = vmatpush1.msra.mxu0 %v1353
  %1417 = vmatprep.subr.mxu0 0.0
  %1418 = vmatpush1.msra.mxu0 %v1348
  %1419 = vmatprep.subr.mxu0 0.0
  %1420 = vmatpush1.msra.mxu0 %v1343
  %1421 = vmatprep.subr.mxu0 0.0
  %1422 = vmatpush1.msra.mxu0 %v1338
  %1423 = vmatprep.subr.mxu0 0.0
  %1424 = vmatpush1.msra.mxu0 %v1333
  %1425 = vmatprep.subr.mxu0 0.0
  %1426 = vmatpush1.msra.mxu0 %v1328
  %1427 = vmatprep.subr.mxu0 0.0
  %1428 = vmatpush1.msra.mxu0 %v1323
  %1429 = vmatprep.subr.mxu0 0.0
  %1430 = vmatpush1.msra.mxu0 %v1318
  %1431 = vmatprep.subr.mxu0 0.0
  %1432 = vmatpush1.msra.mxu0 %v1313
  %1433 = vmatprep.subr.mxu0 0.0
  %1434 = vmatpush1.msra.mxu0 %v1308
  %1435 = vmatprep.subr.mxu0 0.0
  %1436 = vmatpush2.msra.mxu0 0.0
  %1437 = vmatprep.subr.mxu0 0.0
  %1438 = vmatpush2.msra.mxu0 0.0
  %1439 = vmatprep.subr.mxu0 0.0
  %1440 = vmatpush2.msra.mxu0 0.0
  %1441 = vmatprep.subr.mxu0 0.0
  %1442 = vmatpush2.msra.mxu0 0.0
  %1443 = vmatprep.subr.mxu0 0.0
  %1444 = vmatpush2.msra.mxu0 0.0
  %1445 = vmatprep.subr.mxu0 0.0
  %1446 = vmatpush2.msra.mxu0 0.0
  %1447 = vmatprep.subr.mxu0 0.0
  %1448 = vmatpush2.msra.mxu0 0.0
  %1449 = vmatprep.subr.mxu0 0.0
  %1450 = vmatpush2.msra.mxu0 0.0
  %1451 = vmatprep.subr.mxu0 0.0
  %1452 = vmatpush2.msra.mxu0 0.0
  %1453 = vmatprep.subr.mxu0 0.0
  %1454 = vmatpush2.msra.mxu0 0.0
  %1455 = vmatprep.subr.mxu0 0.0
  %1456 = vmatpush2.msra.mxu0 0.0
  %1457 = vmatprep.subr.mxu0 0.0
  %1458 = vmatpush2.msra.mxu0 0.0
  %1459 = vmatprep.subr.mxu0 0.0
  %1460 = vmatpush2.msra.mxu0 0.0
  %1461 = vmatprep.subr.mxu0 0.0
  %1462 = vmatpush2.msra.mxu0 0.0
  %1463 = vmatprep.subr.mxu0 0.0
  %1464 = vmatpush2.msra.mxu0 0.0
  %1465 = vmatprep.subr.mxu0 0.0
  %1466 = vmatpush2.msra.mxu0 0.0
  %1467 = vmatprep.mubr.f32.mxu0 0.0
  %1468 = vmatmul.mubr.f32.gmra.mxu0 1.0
  %v1469 = vpop.f32.mrf.mxu0
  %v1470 = vadd.f32 0.0, %v1469
  %v1471 = vpop.f32.mrf.mxu0
  %1472 = vdwg.mxu0
  %v1473 = vadd.f32 %v1088, %v1470
  %v1474 = vmul.f32 %v1308, %v1308
  %v1475 = vmul.f32 %v1313, %v1313
  %v1476 = vmul.f32 %v1318, %v1318
  %v1477 = vmul.f32 %v1323, %v1323
  %v1478 = vmul.f32 %v1328, %v1328
  %v1479 = vmul.f32 %v1333, %v1333
  %v1480 = vmul.f32 %v1338, %v1338
  %v1481 = vmul.f32 %v1343, %v1343
  %v1482 = vmul.f32 %v1348, %v1348
  %v1483 = vmul.f32 %v1353, %v1353
  %v1484 = vmul.f32 %v1358, %v1358
  %v1485 = vmul.f32 %v1363, %v1363
  %v1486 = vmul.f32 %v1368, %v1368
  %v1487 = vmul.f32 %v1373, %v1373
  %v1488 = vmul.f32 %v1378, %v1378
  %v1489 = vmul.f32 %v1383, %v1383
  %1490 = vmatprep.subr.mxu0 0.0
  %1491 = vmatpush1.msra.mxu0 %v1489
  %1492 = vmatprep.subr.mxu0 0.0
  %1493 = vmatpush1.msra.mxu0 %v1488
  %1494 = vmatprep.subr.mxu0 0.0
  %1495 = vmatpush1.msra.mxu0 %v1487
  %1496 = vmatprep.subr.mxu0 0.0
  %1497 = vmatpush1.msra.mxu0 %v1486
  %1498 = vmatprep.subr.mxu0 0.0
  %1499 = vmatpush1.msra.mxu0 %v1485
  %1500 = vmatprep.subr.mxu0 0.0
  %1501 = vmatpush1.msra.mxu0 %v1484
  %1502 = vmatprep.subr.mxu0 0.0
  %1503 = vmatpush1.msra.mxu0 %v1483
  %1504 = vmatprep.subr.mxu0 0.0
  %1505 = vmatpush1.msra.mxu0 %v1482
  %1506 = vmatprep.subr.mxu0 0.0
  %1507 = vmatpush1.msra.mxu0 %v1481
  %1508 = vmatprep.subr.mxu0 0.0
  %1509 = vmatpush1.msra.mxu0 %v1480
  %1510 = vmatprep.subr.mxu0 0.0
  %1511 = vmatpush1.msra.mxu0 %v1479
  %1512 = vmatprep.subr.mxu0 0.0
  %1513 = vmatpush1.msra.mxu0 %v1478
  %1514 = vmatprep.subr.mxu0 0.0
  %1515 = vmatpush1.msra.mxu0 %v1477
  %1516 = vmatprep.subr.mxu0 0.0
  %1517 = vmatpush1.msra.mxu0 %v1476
  %1518 = vmatprep.subr.mxu0 0.0
  %1519 = vmatpush1.msra.mxu0 %v1475
  %1520 = vmatprep.subr.mxu0 0.0
  %1521 = vmatpush1.msra.mxu0 %v1474
  %1522 = vmatprep.subr.mxu0 0.0
  %1523 = vmatpush2.msra.mxu0 0.0
  %1524 = vmatprep.subr.mxu0 0.0
  %1525 = vmatpush2.msra.mxu0 0.0
  %1526 = vmatprep.subr.mxu0 0.0
  %1527 = vmatpush2.msra.mxu0 0.0
  %1528 = vmatprep.subr.mxu0 0.0
  %1529 = vmatpush2.msra.mxu0 0.0
  %1530 = vmatprep.subr.mxu0 0.0
  %1531 = vmatpush2.msra.mxu0 0.0
  %1532 = vmatprep.subr.mxu0 0.0
  %1533 = vmatpush2.msra.mxu0 0.0
  %1534 = vmatprep.subr.mxu0 0.0
  %1535 = vmatpush2.msra.mxu0 0.0
  %1536 = vmatprep.subr.mxu0 0.0
  %1537 = vmatpush2.msra.mxu0 0.0
  %1538 = vmatprep.subr.mxu0 0.0
  %1539 = vmatpush2.msra.mxu0 0.0
  %1540 = vmatprep.subr.mxu0 0.0
  %1541 = vmatpush2.msra.mxu0 0.0
  %1542 = vmatprep.subr.mxu0 0.0
  %1543 = vmatpush2.msra.mxu0 0.0
  %1544 = vmatprep.subr.mxu0 0.0
  %1545 = vmatpush2.msra.mxu0 0.0
  %1546 = vmatprep.subr.mxu0 0.0
  %1547 = vmatpush2.msra.mxu0 0.0
  %1548 = vmatprep.subr.mxu0 0.0
  %1549 = vmatpush2.msra.mxu0 0.0
  %1550 = vmatprep.subr.mxu0 0.0
  %1551 = vmatpush2.msra.mxu0 0.0
  %1552 = vmatprep.subr.mxu0 0.0
  %1553 = vmatpush2.msra.mxu0 0.0
  %1554 = vmatprep.mubr.f32.mxu0 0.0
  %1555 = vmatmul.mubr.f32.gmra.mxu0 1.0
  %v1556 = vpop.f32.mrf.mxu0
  %v1557 = vadd.f32 0.0, %v1556
  %v1558 = vpop.f32.mrf.mxu0
  %1559 = vdwg.mxu0
  %v1560 = vadd.f32 %v1175, %v1557
  %v1561 = vmul.f32 %v1473, 0.001953125
  %v1562 = vmul.f32 %v1560, 0.001953125
  %v1563 = vmul.f32 %v1561, %v1561
  %v1564 = vsub.f32 %v1562, %v1563
  %v1565 = vld [vmem:[%s2] sm:$0x1]
  %v1566 = vadd.f32 %v1564, 1e-05
  %v1567 = vrsqrt.pop %v1566
  %v1568 = vmul.f32 %v1565, %v1567
  %v1569 = vld [vmem:[%s3] sm:$0x1]
  %v1570 = vmul.f32 %v1561, %v1568
  %v1571 = vsub.f32 %v1569, %v1570
  %v1572 = vld [vmem:[%s4] sm:$0xff]
  %v1573 = vld [vmem:[%s4 + $0x8] sm:$0xff]
  %v1574 = vld [vmem:[%s4 + $0x10] sm:$0xff]
  %v1575 = vld [vmem:[%s4 + $0x18] sm:$0xff]
  %v1576 = vld [vmem:[%s4 + $0x20] sm:$0xff]
  %v1577 = vld [vmem:[%s4 + $0x28] sm:$0xff]
  %v1578 = vld [vmem:[%s4 + $0x30] sm:$0xff]
  %v1579 = vld [vmem:[%s4 + $0x38] sm:$0xff]
  %v1580 = vld [vmem:[%s4 + $0x40] sm:$0xff]
  %v1581 = vld [vmem:[%s4 + $0x48] sm:$0xff]
  %v1582 = vld [vmem:[%s4 + $0x50] sm:$0xff]
  %v1583 = vld [vmem:[%s4 + $0x58] sm:$0xff]
  %v1584 = vld [vmem:[%s4 + $0x60] sm:$0xff]
  %v1585 = vld [vmem:[%s4 + $0x68] sm:$0xff]
  %v1586 = vld [vmem:[%s4 + $0x70] sm:$0xff]
  %v1587 = vld [vmem:[%s4 + $0x78] sm:$0xff]
  %v1589 = vlaneseq
  %v1590 = vshrl.u32 %v1589, 7
  %v1591 = vsub.s32 0, %v1590
  %v1592 = vrot.slane %v1568, %v1591
  %v1594 = vmul.f32 %v1572, %v1592
  %v1595 = vmul.f32 %v1573, %v1592
  %v1596 = vmul.f32 %v1574, %v1592
  %v1597 = vmul.f32 %v1575, %v1592
  %v1598 = vmul.f32 %v1576, %v1592
  %v1599 = vmul.f32 %v1577, %v1592
  %v1600 = vmul.f32 %v1578, %v1592
  %v1601 = vmul.f32 %v1579, %v1592
  %v1602 = vmul.f32 %v1580, %v1592
  %v1603 = vmul.f32 %v1581, %v1592
  %v1604 = vmul.f32 %v1582, %v1592
  %v1605 = vmul.f32 %v1583, %v1592
  %v1606 = vmul.f32 %v1584, %v1592
  %v1607 = vmul.f32 %v1585, %v1592
  %v1608 = vmul.f32 %v1586, %v1592
  %v1609 = vmul.f32 %v1587, %v1592
  %v1611 = vlaneseq
  %v1612 = vshrl.u32 %v1611, 7
  %v1613 = vsub.s32 0, %v1612
  %v1614 = vrot.slane %v1571, %v1613
  %v1616 = vadd.f32 %v1594, %v1614
  %v1617 = vadd.f32 %v1595, %v1614
  %v1618 = vadd.f32 %v1596, %v1614
  %v1619 = vadd.f32 %v1597, %v1614
  %v1620 = vadd.f32 %v1598, %v1614
  %v1621 = vadd.f32 %v1599, %v1614
  %v1622 = vadd.f32 %v1600, %v1614
  %v1623 = vadd.f32 %v1601, %v1614
  %v1624 = vadd.f32 %v1602, %v1614
  %v1625 = vadd.f32 %v1603, %v1614
  %v1626 = vadd.f32 %v1604, %v1614
  %v1627 = vadd.f32 %v1605, %v1614
  %v1628 = vadd.f32 %v1606, %v1614
  %v1629 = vadd.f32 %v1607, %v1614
  %v1630 = vadd.f32 %v1608, %v1614
  %v1631 = vadd.f32 %v1609, %v1614
  %1632 = vst [vmem:[%s4] sm:$0xff] %v1616
  %1633 = vst [vmem:[%s4 + $0x8] sm:$0xff] %v1617
  %1634 = vst [vmem:[%s4 + $0x10] sm:$0xff] %v1618
  %1635 = vst [vmem:[%s4 + $0x18] sm:$0xff] %v1619
  %1636 = vst [vmem:[%s4 + $0x20] sm:$0xff] %v1620
  %1637 = vst [vmem:[%s4 + $0x28] sm:$0xff] %v1621
  %1638 = vst [vmem:[%s4 + $0x30] sm:$0xff] %v1622
  %1639 = vst [vmem:[%s4 + $0x38] sm:$0xff] %v1623
  %1640 = vst [vmem:[%s4 + $0x40] sm:$0xff] %v1624
  %1641 = vst [vmem:[%s4 + $0x48] sm:$0xff] %v1625
  %1642 = vst [vmem:[%s4 + $0x50] sm:$0xff] %v1626
  %1643 = vst [vmem:[%s4 + $0x58] sm:$0xff] %v1627
  %1644 = vst [vmem:[%s4 + $0x60] sm:$0xff] %v1628
  %1645 = vst [vmem:[%s4 + $0x68] sm:$0xff] %v1629
  %1646 = vst [vmem:[%s4 + $0x70] sm:$0xff] %v1630
  %1647 = vst [vmem:[%s4 + $0x78] sm:$0xff] %v1631
  %v1648 = vld [vmem:[%s478] sm:$0xff]
  %v1649 = vld [vmem:[%s478 + $0x8] sm:$0xff]
  %v1650 = vld [vmem:[%s478 + $0x10] sm:$0xff]
  %v1651 = vld [vmem:[%s478 + $0x18] sm:$0xff]
  %v1652 = vld [vmem:[%s478 + $0x20] sm:$0xff]
  %v1653 = vld [vmem:[%s478 + $0x28] sm:$0xff]
  %v1654 = vld [vmem:[%s478 + $0x30] sm:$0xff]
  %v1655 = vld [vmem:[%s478 + $0x38] sm:$0xff]
  %v1656 = vld [vmem:[%s478 + $0x40] sm:$0xff]
  %v1657 = vld [vmem:[%s478 + $0x48] sm:$0xff]
  %v1658 = vld [vmem:[%s478 + $0x50] sm:$0xff]
  %v1659 = vld [vmem:[%s478 + $0x58] sm:$0xff]
  %v1660 = vld [vmem:[%s478 + $0x60] sm:$0xff]
  %v1661 = vld [vmem:[%s478 + $0x68] sm:$0xff]
  %v1662 = vld [vmem:[%s478 + $0x70] sm:$0xff]
  %v1663 = vld [vmem:[%s478 + $0x78] sm:$0xff]
  %v1664 = vmul.f32 %v1648, %v1592
  %v1665 = vmul.f32 %v1649, %v1592
  %v1666 = vmul.f32 %v1650, %v1592
  %v1667 = vmul.f32 %v1651, %v1592
  %v1668 = vmul.f32 %v1652, %v1592
  %v1669 = vmul.f32 %v1653, %v1592
  %v1670 = vmul.f32 %v1654, %v1592
  %v1671 = vmul.f32 %v1655, %v1592
  %v1672 = vmul.f32 %v1656, %v1592
  %v1673 = vmul.f32 %v1657, %v1592
  %v1674 = vmul.f32 %v1658, %v1592
  %v1675 = vmul.f32 %v1659, %v1592
  %v1676 = vmul.f32 %v1660, %v1592
  %v1677 = vmul.f32 %v1661, %v1592
  %v1678 = vmul.f32 %v1662, %v1592
  %v1679 = vmul.f32 %v1663, %v1592
  %v1680 = vadd.f32 %v1664, %v1614
  %v1681 = vadd.f32 %v1665, %v1614
  %v1682 = vadd.f32 %v1666, %v1614
  %v1683 = vadd.f32 %v1667, %v1614
  %v1684 = vadd.f32 %v1668, %v1614
  %v1685 = vadd.f32 %v1669, %v1614
  %v1686 = vadd.f32 %v1670, %v1614
  %v1687 = vadd.f32 %v1671, %v1614
  %v1688 = vadd.f32 %v1672, %v1614
  %v1689 = vadd.f32 %v1673, %v1614
  %v1690 = vadd.f32 %v1674, %v1614
  %v1691 = vadd.f32 %v1675, %v1614
  %v1692 = vadd.f32 %v1676, %v1614
  %v1693 = vadd.f32 %v1677, %v1614
  %v1694 = vadd.f32 %v1678, %v1614
  %v1695 = vadd.f32 %v1679, %v1614
  %1696 = vst [vmem:[%s478] sm:$0xff] %v1680
  %1697 = vst [vmem:[%s478 + $0x8] sm:$0xff] %v1681
  %1698 = vst [vmem:[%s478 + $0x10] sm:$0xff] %v1682
  %1699 = vst [vmem:[%s478 + $0x18] sm:$0xff] %v1683
  %1700 = vst [vmem:[%s478 + $0x20] sm:$0xff] %v1684
  %1701 = vst [vmem:[%s478 + $0x28] sm:$0xff] %v1685
  %1702 = vst [vmem:[%s478 + $0x30] sm:$0xff] %v1686
  %1703 = vst [vmem:[%s478 + $0x38] sm:$0xff] %v1687
  %1704 = vst [vmem:[%s478 + $0x40] sm:$0xff] %v1688
  %1705 = vst [vmem:[%s478 + $0x48] sm:$0xff] %v1689
  %1706 = vst [vmem:[%s478 + $0x50] sm:$0xff] %v1690
  %1707 = vst [vmem:[%s478 + $0x58] sm:$0xff] %v1691
  %1708 = vst [vmem:[%s478 + $0x60] sm:$0xff] %v1692
  %1709 = vst [vmem:[%s478 + $0x68] sm:$0xff] %v1693
  %1710 = vst [vmem:[%s478 + $0x70] sm:$0xff] %v1694
  %1711 = vst [vmem:[%s478 + $0x78] sm:$0xff] %v1695
  %v1712 = vld [vmem:[%s1001] sm:$0xff]
  %v1713 = vld [vmem:[%s1001 + $0x8] sm:$0xff]
  %v1714 = vld [vmem:[%s1001 + $0x10] sm:$0xff]
  %v1715 = vld [vmem:[%s1001 + $0x18] sm:$0xff]
  %v1716 = vld [vmem:[%s1001 + $0x20] sm:$0xff]
  %v1717 = vld [vmem:[%s1001 + $0x28] sm:$0xff]
  %v1718 = vld [vmem:[%s1001 + $0x30] sm:$0xff]
  %v1719 = vld [vmem:[%s1001 + $0x38] sm:$0xff]
  %v1720 = vld [vmem:[%s1001 + $0x40] sm:$0xff]
  %v1721 = vld [vmem:[%s1001 + $0x48] sm:$0xff]
  %v1722 = vld [vmem:[%s1001 + $0x50] sm:$0xff]
  %v1723 = vld [vmem:[%s1001 + $0x58] sm:$0xff]
  %v1724 = vld [vmem:[%s1001 + $0x60] sm:$0xff]
  %v1725 = vld [vmem:[%s1001 + $0x68] sm:$0xff]
  %v1726 = vld [vmem:[%s1001 + $0x70] sm:$0xff]
  %v1727 = vld [vmem:[%s1001 + $0x78] sm:$0xff]
  %v1728 = vmul.f32 %v1712, %v1592
  %v1729 = vmul.f32 %v1713, %v1592
  %v1730 = vmul.f32 %v1714, %v1592
  %v1731 = vmul.f32 %v1715, %v1592
  %v1732 = vmul.f32 %v1716, %v1592
  %v1733 = vmul.f32 %v1717, %v1592
  %v1734 = vmul.f32 %v1718, %v1592
  %v1735 = vmul.f32 %v1719, %v1592
  %v1736 = vmul.f32 %v1720, %v1592
  %v1737 = vmul.f32 %v1721, %v1592
  %v1738 = vmul.f32 %v1722, %v1592
  %v1739 = vmul.f32 %v1723, %v1592
  %v1740 = vmul.f32 %v1724, %v1592
  %v1741 = vmul.f32 %v1725, %v1592
  %v1742 = vmul.f32 %v1726, %v1592
  %v1743 = vmul.f32 %v1727, %v1592
  %v1744 = vadd.f32 %v1728, %v1614
  %v1745 = vadd.f32 %v1729, %v1614
  %v1746 = vadd.f32 %v1730, %v1614
  %v1747 = vadd.f32 %v1731, %v1614
  %v1748 = vadd.f32 %v1732, %v1614
  %v1749 = vadd.f32 %v1733, %v1614
  %v1750 = vadd.f32 %v1734, %v1614
  %v1751 = vadd.f32 %v1735, %v1614
  %v1752 = vadd.f32 %v1736, %v1614
  %v1753 = vadd.f32 %v1737, %v1614
  %v1754 = vadd.f32 %v1738, %v1614
  %v1755 = vadd.f32 %v1739, %v1614
  %v1756 = vadd.f32 %v1740, %v1614
  %v1757 = vadd.f32 %v1741, %v1614
  %v1758 = vadd.f32 %v1742, %v1614
  %v1759 = vadd.f32 %v1743, %v1614
  %1760 = vst [vmem:[%s1001] sm:$0xff] %v1744
  %1761 = vst [vmem:[%s1001 + $0x8] sm:$0xff] %v1745
  %1762 = vst [vmem:[%s1001 + $0x10] sm:$0xff] %v1746
  %1763 = vst [vmem:[%s1001 + $0x18] sm:$0xff] %v1747
  %1764 = vst [vmem:[%s1001 + $0x20] sm:$0xff] %v1748
  %1765 = vst [vmem:[%s1001 + $0x28] sm:$0xff] %v1749
  %1766 = vst [vmem:[%s1001 + $0x30] sm:$0xff] %v1750
  %1767 = vst [vmem:[%s1001 + $0x38] sm:$0xff] %v1751
  %1768 = vst [vmem:[%s1001 + $0x40] sm:$0xff] %v1752
  %1769 = vst [vmem:[%s1001 + $0x48] sm:$0xff] %v1753
  %1770 = vst [vmem:[%s1001 + $0x50] sm:$0xff] %v1754
  %1771 = vst [vmem:[%s1001 + $0x58] sm:$0xff] %v1755
  %1772 = vst [vmem:[%s1001 + $0x60] sm:$0xff] %v1756
  %1773 = vst [vmem:[%s1001 + $0x68] sm:$0xff] %v1757
  %1774 = vst [vmem:[%s1001 + $0x70] sm:$0xff] %v1758
  %1775 = vst [vmem:[%s1001 + $0x78] sm:$0xff] %v1759
  %v1776 = vld [vmem:[%s1386] sm:$0xff]
  %v1777 = vld [vmem:[%s1386 + $0x8] sm:$0xff]
  %v1778 = vld [vmem:[%s1386 + $0x10] sm:$0xff]
  %v1779 = vld [vmem:[%s1386 + $0x18] sm:$0xff]
  %v1780 = vld [vmem:[%s1386 + $0x20] sm:$0xff]
  %v1781 = vld [vmem:[%s1386 + $0x28] sm:$0xff]
  %v1782 = vld [vmem:[%s1386 + $0x30] sm:$0xff]
  %v1783 = vld [vmem:[%s1386 + $0x38] sm:$0xff]
  %v1784 = vld [vmem:[%s1386 + $0x40] sm:$0xff]
  %v1785 = vld [vmem:[%s1386 + $0x48] sm:$0xff]
  %v1786 = vld [vmem:[%s1386 + $0x50] sm:$0xff]
  %v1787 = vld [vmem:[%s1386 + $0x58] sm:$0xff]
  %v1788 = vld [vmem:[%s1386 + $0x60] sm:$0xff]
  %v1789 = vld [vmem:[%s1386 + $0x68] sm:$0xff]
  %v1790 = vld [vmem:[%s1386 + $0x70] sm:$0xff]
  %v1791 = vld [vmem:[%s1386 + $0x78] sm:$0xff]
  %v1792 = vmul.f32 %v1776, %v1592
  %v1793 = vmul.f32 %v1777, %v1592
  %v1794 = vmul.f32 %v1778, %v1592
  %v1795 = vmul.f32 %v1779, %v1592
  %v1796 = vmul.f32 %v1780, %v1592
  %v1797 = vmul.f32 %v1781, %v1592
  %v1798 = vmul.f32 %v1782, %v1592
  %v1799 = vmul.f32 %v1783, %v1592
  %v1800 = vmul.f32 %v1784, %v1592
  %v1801 = vmul.f32 %v1785, %v1592
  %v1802 = vmul.f32 %v1786, %v1592
  %v1803 = vmul.f32 %v1787, %v1592
  %v1804 = vmul.f32 %v1788, %v1592
  %v1805 = vmul.f32 %v1789, %v1592
  %v1806 = vmul.f32 %v1790, %v1592
  %v1807 = vmul.f32 %v1791, %v1592
  %v1808 = vadd.f32 %v1792, %v1614
  %v1809 = vadd.f32 %v1793, %v1614
  %v1810 = vadd.f32 %v1794, %v1614
  %v1811 = vadd.f32 %v1795, %v1614
  %v1812 = vadd.f32 %v1796, %v1614
  %v1813 = vadd.f32 %v1797, %v1614
  %v1814 = vadd.f32 %v1798, %v1614
  %v1815 = vadd.f32 %v1799, %v1614
  %v1816 = vadd.f32 %v1800, %v1614
  %v1817 = vadd.f32 %v1801, %v1614
  %v1818 = vadd.f32 %v1802, %v1614
  %v1819 = vadd.f32 %v1803, %v1614
  %v1820 = vadd.f32 %v1804, %v1614
  %v1821 = vadd.f32 %v1805, %v1614
  %v1822 = vadd.f32 %v1806, %v1614
  %v1823 = vadd.f32 %v1807, %v1614
  %1824 = vst [vmem:[%s1386] sm:$0xff] %v1808
  %1825 = vst [vmem:[%s1386 + $0x8] sm:$0xff] %v1809
  %1826 = vst [vmem:[%s1386 + $0x10] sm:$0xff] %v1810
  %1827 = vst [vmem:[%s1386 + $0x18] sm:$0xff] %v1811
  %1828 = vst [vmem:[%s1386 + $0x20] sm:$0xff] %v1812
  %1829 = vst [vmem:[%s1386 + $0x28] sm:$0xff] %v1813
  %1830 = vst [vmem:[%s1386 + $0x30] sm:$0xff] %v1814
  %1831 = vst [vmem:[%s1386 + $0x38] sm:$0xff] %v1815
  %1832 = vst [vmem:[%s1386 + $0x40] sm:$0xff] %v1816
  %1833 = vst [vmem:[%s1386 + $0x48] sm:$0xff] %v1817
  %1834 = vst [vmem:[%s1386 + $0x50] sm:$0xff] %v1818
  %1835 = vst [vmem:[%s1386 + $0x58] sm:$0xff] %v1819
  %1836 = vst [vmem:[%s1386 + $0x60] sm:$0xff] %v1820
  %1837 = vst [vmem:[%s1386 + $0x68] sm:$0xff] %v1821
  %1838 = vst [vmem:[%s1386 + $0x70] sm:$0xff] %v1822
  %1839 = vst [vmem:[%s1386 + $0x78] sm:$0xff] %v1823
  // Predicated region
  $region18: #{rgb_forward.1} parent=0 // pred_check
    _
  $region19: #{rgb_forward.1} parent=0 // pred_check_branch
    %1841 = sbr.rel (0) target = $region21
  $region20: #{rgb_forward.1} parent=0 // pred_region
    _
  $region21: #{rgb_forward.1} parent=0 // pred_fallthru
    _
  // Predicated region
  $region22: #{rgb_forward.1} parent=0 // pred_check
    _
  $region23: #{rgb_forward.1} parent=0 // pred_check_branch
    %1843 = sbr.rel (0) target = $region25
  $region24: #{rgb_forward.1} parent=0 // pred_region
    _
  $region25: #{rgb_forward.1} parent=0 // pred_fallthru
    _

</llo_original>
